<compile_context>
chip_gen: v7x
topology: tpu7x:2x2x1
jax: 0.10.0
libtpu: 0.0.40
codegen_flags: <defaults>
</compile_context>

<pallas_src>
import jax
import jax.numpy as jnp
from jax.experimental import pallas as pl
from jax.experimental.pallas import tpu as pltpu

N_FEATURE = 5
OUT_FEATURE = 5
N_HIDDEN = 32      # small hidden for the demo (module default is 256)
N_LAYERS = 2       # fused kernel is specialized to the module's 2 layers
BATCH = 2
SEQ = 8

_VMEM = pl.BlockSpec(memory_space=pltpu.MemorySpace.VMEM)


# ----------------------------------------------------------------------------
# Fused Pallas kernel: 2-layer LSTM over the full sequence + FC head
# ----------------------------------------------------------------------------
def _stock_rnn_kernel(x_ref, wih0_ref, b0_ref, wf_ref, b1_ref,
                      fcw_ref, fcb_ref, h0_ref, c0_ref,
                      out_ref, hn_ref, cn_ref, xh_ref):
    """Inputs (all VMEM-resident):
      x_ref:    (T*Bp, Fp)  time-major flattened input (row = t*Bp + b), F padded
      wih0_ref: (Fp, 4H)    layer-0 input weights, pre-transposed, zero-row padded
      b0_ref:   (1, 4H)     b_ih0 + b_hh0
      wf_ref:   (2H, 8H)    fused block matrix [[W_hh0^T | W_ih1^T],[0 | W_hh1^T]]
      b1_ref:   (1, 4H)     b_ih1 + b_hh1
      fcw_ref:  (H, O)      FC weight, pre-transposed
      fcb_ref:  (1, O)      FC bias
      h0_ref:   (2, Bp, H)  initial hidden states
      c0_ref:   (2, Bp, H)  initial cell states
    Outputs:
      out_ref:  (Bp, O)     fc(h1_final)
      hn_ref:   (2, Bp, H)  final hidden states
      cn_ref:   (2, Bp, H)  final cell states
    Scratch:
      xh_ref:   (Bp, 2H)    persistent packed [h0 | h1] fused-dot LHS
    """
    Bp = h0_ref.shape[1]
    H = h0_ref.shape[2]
    T = x_ref.shape[0] // Bp
    H4 = 4 * H

    # Hoisted layer-0 input projection for all timesteps (b0 folded in).
    xg = (jnp.dot(x_ref[...], wih0_ref[...],
                  preferred_element_type=jnp.float32)
          + b0_ref[...])                                   # (T*Bp, 4H)

    # TODO(synk): for production H=256 on v6e/v7x, store wf/wih0/fc_w in bf16
    #             (f32 accumulation via preferred_element_type) to halve weight
    #             VMEM/DMA; keep f32 for the tiny demo and for v5e VPU/EUP math.
    wf = wf_ref[...]

    # Hoisted b1 broadcast: JAX does not CSE broadcast_in_dim, so doing this
    # inside the unrolled loop would emit T broadcasts.
    b1b = jnp.broadcast_to(b1_ref[...], (Bp, H4))

    h0 = h0_ref[0]
    c0 = c0_ref[0]
    h1 = h0_ref[1]
    c1 = c0_ref[1]

    # Pack [h0 | h1] into a persistent lane-contiguous scratch (no per-step
    # jnp.concatenate -> no XLU lane shifts on the serial recurrence path).
    xh_ref[:, 0:H] = h0
    xh_ref[:, H:2 * H] = h1

    def cell(gates, c):
        # PyTorch gate order: input, forget, cell(g), output.
        # Batched nonlinearities: one full-width sigmoid + one full-width tanh
        # over the whole (Bp, 4H) gates tile, then slice (3 EUP pushes/cell).
        sg = jax.nn.sigmoid(gates)
        th = jnp.tanh(gates)
        i = sg[:, 0 * H:1 * H]
        f = sg[:, 1 * H:2 * H]
        g = th[:, 2 * H:3 * H]
        o = sg[:, 3 * H:4 * H]
        c_new = f * c + i * g
        h_new = o * jnp.tanh(c_new)
        return h_new, c_new

    # Prime layer-0's first recurrent term with the same fused weight matrix
    # (right half of this priming dot is discarded).
    r0 = jnp.dot(xh_ref[...], wf, preferred_element_type=jnp.float32)[:, 0:H4]

    # Static fully-unrolled time loop (T=8, known at trace time).
    # TODO(synk): for production-length sequences switch to lax.fori_loop with
    #             h/c carried in VMEM scratch, and time-chunk the hoisted xg
    #             projection (grid axis / emit_pipeline) to bound VMEM on v7x.
    for t in range(T):
        # Layer 0: recurrent term r0 was produced by the previous fused dot.
        g0 = xg[t * Bp:(t + 1) * Bp, :] + r0
        h0, c0 = cell(g0, c0)
        xh_ref[:, 0:H] = h0

        # TODO(synk): inter-layer LSTM dropout is identity in eval mode.

        # ONE fused MXU dot per step:
        #   cols [0,4H)  -> layer-0 recurrent term for step t+1
        #   cols [4H,8H) -> layer-1 gates for step t
        fused = jnp.dot(xh_ref[...], wf, preferred_element_type=jnp.float32)
        r0 = fused[:, 0:H4]
        g1 = fused[:, H4:2 * H4] + b1b
        h1, c1 = cell(g1, c1)
        xh_ref[:, H:2 * H] = h1

    # FC head on the final top-layer hidden (dropout = identity in eval mode).
    out_ref[...] = (jnp.dot(h1, fcw_ref[...],
                            preferred_element_type=jnp.float32)
                    + fcb_ref[...]).astype(out_ref.dtype)
    hn_ref[0] = h0
    hn_ref[1] = h1
    cn_ref[0] = c0
    cn_ref[1] = c1


# ----------------------------------------------------------------------------
# Parameter construction / one-time preparation
# ----------------------------------------------------------------------------
def init_params(key, n_feature=N_FEATURE, out_feature=OUT_FEATURE,
                n_hidden=N_HIDDEN, n_layers=N_LAYERS):
    """PyTorch-layout parameters: U(-1/sqrt(H), 1/sqrt(H))."""
    params = {}
    bound = 1.0 / jnp.sqrt(jnp.float32(n_hidden))
    keys = jax.random.split(key, n_layers * 4 + 2)
    k = 0
    for layer in range(n_layers):
        in_size = n_feature if layer == 0 else n_hidden
        params[f"w_ih_l{layer}"] = jax.random.uniform(
            keys[k], (4 * n_hidden, in_size), jnp.float32, -bound, bound); k += 1
        params[f"w_hh_l{layer}"] = jax.random.uniform(
            keys[k], (4 * n_hidden, n_hidden), jnp.float32, -bound, bound); k += 1
        params[f"b_ih_l{layer}"] = jax.random.uniform(
            keys[k], (4 * n_hidden,), jnp.float32, -bound, bound); k += 1
        params[f"b_hh_l{layer}"] = jax.random.uniform(
            keys[k], (4 * n_hidden,), jnp.float32, -bound, bound); k += 1
    params["fc_w"] = jax.random.uniform(
        keys[k], (out_feature, n_hidden), jnp.float32, -bound, bound); k += 1
    params["fc_b"] = jax.random.uniform(
        keys[k], (out_feature,), jnp.float32, -bound, bound)
    return params


def prepare_params(params):
    """One-time layout prep (transposes / bias sums / fused block matrix)."""
    H = params["w_hh_l0"].shape[1]
    F = params["w_ih_l0"].shape[1]
    Fp = ((F + 7) // 8) * 8                                 # pad K=5 -> 8

    wih0_t = jnp.transpose(params["w_ih_l0"])               # (F, 4H)
    wih0_t = jnp.pad(wih0_t, ((0, Fp - F), (0, 0)))         # (Fp, 4H), zero rows

    # Fused per-step weight: [[W_hh0^T | W_ih1^T], [0 | W_hh1^T]]  (2H, 8H)
    top = jnp.concatenate([jnp.transpose(params["w_hh_l0"]),
                           jnp.transpose(params["w_ih_l1"])], axis=1)
    bot = jnp.concatenate([jnp.zeros((H, 4 * H), jnp.float32),
                           jnp.transpose(params["w_hh_l1"])], axis=1)
    wf = jnp.concatenate([top, bot], axis=0)                 # (2H, 8H)

    return {
        "wih0_t": wih0_t,                                    # (Fp, 4H)
        "b0": (params["b_ih_l0"] + params["b_hh_l0"]).reshape(1, 4 * H),
        "wf": wf,                                            # (2H, 8H)
        "b1": (params["b_ih_l1"] + params["b_hh_l1"]).reshape(1, 4 * H),
        "fc_w_t": jnp.transpose(params["fc_w"]),             # (H, O)
        "fc_b": params["fc_b"].reshape(1, -1),                # (1, O)
    }


def init_hidden(batch_size, n_layers=N_LAYERS, n_hidden=N_HIDDEN):
    return (jnp.zeros((n_layers, batch_size, n_hidden), jnp.float32),
            jnp.zeros((n_layers, batch_size, n_hidden), jnp.float32))


# ----------------------------------------------------------------------------
# Forward
# ----------------------------------------------------------------------------
@jax.jit
def stock_rnn_forward(prep, x_btf, hidden):
    """x_btf: (B, T, n_feature); hidden: ((2,B,H), (2,B,H)) -> (out, (h_n, c_n))."""
    h_all, c_all = hidden
    B, T, F = x_btf.shape
    L, _, H = h_all.shape
    O = prep["fc_b"].shape[-1]
    Fp = prep["wih0_t"].shape[0]

    # Pad batch to a sublane multiple (aligned per-step slices, MXU M != 2) and
    # the feature dim to 8 (unmasked K tile); padded rows/cols are benign and
    # dropped on output.
    Bp = max(8, ((B + 7) // 8) * 8)
    pad_b = Bp - B

    x_tbf = jnp.transpose(x_btf, (1, 0, 2))                 # (T, B, F) time-major
    x_tbf = jnp.pad(x_tbf, ((0, 0), (0, pad_b), (0, Fp - F)))
    if pad_b:
        h_all = jnp.pad(h_all, ((0, 0), (0, pad_b), (0, 0)))
        c_all = jnp.pad(c_all, ((0, 0), (0, pad_b), (0, 0)))
    x_flat = x_tbf.reshape(T * Bp, Fp)

    # TODO(synk): for batched production inference on v7x (2 TCs), add a
    #             leading batch-chunk grid axis with dimension_semantics=
    #             ("parallel", ...) so each TensorCore takes half the batch.
    out_p, hn_p, cn_p = pl.pallas_call(
        _stock_rnn_kernel,
        out_shape=(
            jax.ShapeDtypeStruct((Bp, O), jnp.float32),
            jax.ShapeDtypeStruct((L, Bp, H), jnp.float32),
            jax.ShapeDtypeStruct((L, Bp, H), jnp.float32),
        ),
        in_specs=[_VMEM] * 9,
        out_specs=(_VMEM, _VMEM, _VMEM),
        scratch_shapes=[pltpu.VMEM((Bp, 2 * H), jnp.float32)],
        compiler_params=pltpu.CompilerParams(
            vmem_limit_bytes=32 * 1024 * 1024),
    )(x_flat, prep["wih0_t"], prep["b0"], prep["wf"], prep["b1"],
      prep["fc_w_t"], prep["fc_b"], h_all, c_all)

    return out_p[:B], (hn_p[:, :B], cn_p[:, :B])


# ----------------------------------------------------------------------------
# Pure-JAX reference (for correctness check)
# ----------------------------------------------------------------------------
def _reference_forward(params, x_btf, hidden):
    h_all, c_all = hidden
    H = h_all.shape[-1]

    def layer(x_tbf, w_ih, w_hh, b_ih, b_hh, h, c):
        ys = []
        for t in range(x_tbf.shape[0]):
            gates = x_tbf[t] @ w_ih.T + b_ih + h @ w_hh.T + b_hh
            i = jax.nn.sigmoid(gates[:, 0 * H:1 * H])
            f = jax.nn.sigmoid(gates[:, 1 * H:2 * H])
            g = jnp.tanh(gates[:, 2 * H:3 * H])
            o = jax.nn.sigmoid(gates[:, 3 * H:4 * H])
            c = f * c + i * g
            h = o * jnp.tanh(c)
            ys.append(h)
        return jnp.stack(ys), h, c

    x_tbf = jnp.transpose(x_btf, (1, 0, 2))
    y0, h0f, c0f = layer(x_tbf, params["w_ih_l0"], params["w_hh_l0"],
                         params["b_ih_l0"], params["b_hh_l0"],
                         h_all[0], c_all[0])
    y1, h1f, c1f = layer(y0, params["w_ih_l1"], params["w_hh_l1"],
                         params["b_ih_l1"], params["b_hh_l1"],
                         h_all[1], c_all[1])
    out = y1[-1] @ params["fc_w"].T + params["fc_b"]
    return out, (jnp.stack([h0f, h1f]), jnp.stack([c0f, c1f]))


if __name__ == "__main__":
    key = jax.random.PRNGKey(0)
    k_params, k_x = jax.random.split(key)

    params = init_params(k_params)
    prep = prepare_params(params)        # one-time layout prep (not per call)
    x = jax.random.normal(k_x, (BATCH, SEQ, N_FEATURE), jnp.float32)
    hidden = init_hidden(BATCH)

    out, (h_n, c_n) = stock_rnn_forward(prep, x, hidden)
    jax.block_until_ready((out, h_n, c_n))

    assert out.shape == (BATCH, OUT_FEATURE)
    assert h_n.shape == (N_LAYERS, BATCH, N_HIDDEN)
    assert c_n.shape == (N_LAYERS, BATCH, N_HIDDEN)

    ref_out, (ref_h, ref_c) = _reference_forward(params, x, hidden)
    assert jnp.allclose(out, ref_out, atol=1e-3, rtol=1e-3)
    assert jnp.allclose(h_n, ref_h, atol=1e-3, rtol=1e-3)
    assert jnp.allclose(c_n, ref_c, atol=1e-3, rtol=1e-3)

    print("KERNEL_OK")
</pallas_src>

<mosaic_0001>
module attributes {stable_mosaic.version = 11 : i64} {
  func.func @_stock_rnn_kernel(%arg0: memref<64x8xf32, #tpu.memory_space<vmem>>, %arg1: memref<8x128xf32, #tpu.memory_space<vmem>>, %arg2: memref<1x128xf32, #tpu.memory_space<vmem>>, %arg3: memref<64x256xf32, #tpu.memory_space<vmem>>, %arg4: memref<1x128xf32, #tpu.memory_space<vmem>>, %arg5: memref<32x5xf32, #tpu.memory_space<vmem>>, %arg6: memref<1x5xf32, #tpu.memory_space<vmem>>, %arg7: memref<2x8x32xf32, #tpu.memory_space<vmem>>, %arg8: memref<2x8x32xf32, #tpu.memory_space<vmem>>, %arg9: memref<8x5xf32, #tpu.memory_space<vmem>>, %arg10: memref<2x8x32xf32, #tpu.memory_space<vmem>>, %arg11: memref<2x8x32xf32, #tpu.memory_space<vmem>>, %arg12: memref<8x64xf32, #tpu.memory_space<vmem>>) attributes {dimension_semantics = [], scalar_prefetch = 0 : i64, scratch_operands = 1 : i64, tpu.core_type = #tpu.core_type<tc>} {
    %c0 = arith.constant 0 : index
    %c0_0 = arith.constant 0 : index
    %0 = vector.load %arg0[%c0, %c0_0] : memref<64x8xf32, #tpu.memory_space<vmem>>, vector<64x8xf32>
    %c0_1 = arith.constant 0 : index
    %c0_2 = arith.constant 0 : index
    %1 = vector.load %arg1[%c0_1, %c0_2] : memref<8x128xf32, #tpu.memory_space<vmem>>, vector<8x128xf32>
    %cst = arith.constant dense<0.000000e+00> : vector<64x128xf32>
    %2 = tpu.matmul %0, %1, %cst {dimension_numbers = #tpu.dot_dimension_numbers<[1], [0], [0], [1], [0, 0, 1, 1], [], []>} : vector<64x8xf32>, vector<8x128xf32>, vector<64x128xf32> -> vector<64x128xf32>
    %c0_3 = arith.constant 0 : index
    %c0_4 = arith.constant 0 : index
    %3 = vector.load %arg2[%c0_3, %c0_4] : memref<1x128xf32, #tpu.memory_space<vmem>>, vector<1x128xf32>
    %4 = vector.broadcast %3 : vector<1x128xf32> to vector<64x128xf32>
    %5 = arith.addf %2, %4 : vector<64x128xf32>
    %c0_5 = arith.constant 0 : index
    %c0_6 = arith.constant 0 : index
    %6 = vector.load %arg3[%c0_5, %c0_6] : memref<64x256xf32, #tpu.memory_space<vmem>>, vector<64x256xf32>
    %c0_7 = arith.constant 0 : index
    %c0_8 = arith.constant 0 : index
    %7 = vector.load %arg4[%c0_7, %c0_8] : memref<1x128xf32, #tpu.memory_space<vmem>>, vector<1x128xf32>
    %8 = vector.shape_cast %7 : vector<1x128xf32> to vector<1x128xf32>
    %9 = vector.broadcast %8 : vector<1x128xf32> to vector<8x128xf32>
    %c0_9 = arith.constant 0 : index
    %c0_10 = arith.constant 0 : index
    %c0_11 = arith.constant 0 : index
    %10 = vector.load %arg7[%c0_9, %c0_10, %c0_11] : memref<2x8x32xf32, #tpu.memory_space<vmem>>, vector<1x8x32xf32>
    %11 = vector.shape_cast %10 : vector<1x8x32xf32> to vector<8x32xf32>
    %c0_12 = arith.constant 0 : index
    %c0_13 = arith.constant 0 : index
    %c0_14 = arith.constant 0 : index
    %12 = vector.load %arg8[%c0_12, %c0_13, %c0_14] : memref<2x8x32xf32, #tpu.memory_space<vmem>>, vector<1x8x32xf32>
    %13 = vector.shape_cast %12 : vector<1x8x32xf32> to vector<8x32xf32>
    %c1 = arith.constant 1 : index
    %c0_15 = arith.constant 0 : index
    %c0_16 = arith.constant 0 : index
    %14 = vector.load %arg7[%c1, %c0_15, %c0_16] : memref<2x8x32xf32, #tpu.memory_space<vmem>>, vector<1x8x32xf32>
    %15 = vector.shape_cast %14 : vector<1x8x32xf32> to vector<8x32xf32>
    %c1_17 = arith.constant 1 : index
    %c0_18 = arith.constant 0 : index
    %c0_19 = arith.constant 0 : index
    %16 = vector.load %arg8[%c1_17, %c0_18, %c0_19] : memref<2x8x32xf32, #tpu.memory_space<vmem>>, vector<1x8x32xf32>
    %17 = vector.shape_cast %16 : vector<1x8x32xf32> to vector<8x32xf32>
    %c0_20 = arith.constant 0 : index
    %c0_21 = arith.constant 0 : index
    %18 = vector.load %arg12[%c0_20, %c0_21] : memref<8x64xf32, #tpu.memory_space<vmem>>, vector<8x32xf32>
    tpu.vector_store %arg12[%c0_20, %c0_21], %11 {strides = array<i32>} : memref<8x64xf32, #tpu.memory_space<vmem>>, vector<8x32xf32>,
    %c0_22 = arith.constant 0 : index
    %c32 = arith.constant 32 : index
    %19 = vector.load %arg12[%c0_22, %c32] : memref<8x64xf32, #tpu.memory_space<vmem>>, vector<8x32xf32>
    tpu.vector_store %arg12[%c0_22, %c32], %15 {strides = array<i32>} : memref<8x64xf32, #tpu.memory_space<vmem>>, vector<8x32xf32>,
    %c0_23 = arith.constant 0 : index
    %c0_24 = arith.constant 0 : index
    %20 = vector.load %arg12[%c0_23, %c0_24] : memref<8x64xf32, #tpu.memory_space<vmem>>, vector<8x64xf32>
    %cst_25 = arith.constant dense<0.000000e+00> : vector<8x256xf32>
    %21 = tpu.matmul %20, %6, %cst_25 {dimension_numbers = #tpu.dot_dimension_numbers<[1], [0], [0], [1], [0, 0, 1, 1], [], []>} : vector<8x64xf32>, vector<64x256xf32>, vector<8x256xf32> -> vector<8x256xf32>
    %22 = vector.extract_strided_slice %21 {offsets = [0, 0], sizes = [8, 128], strides = [1, 1]} : vector<8x256xf32> to vector<8x128xf32>
    %23 = vector.extract_strided_slice %5 {offsets = [0, 0], sizes = [8, 128], strides = [1, 1]} : vector<64x128xf32> to vector<8x128xf32>
    %24 = arith.addf %23, %22 : vector<8x128xf32>
    %25 = arith.negf %24 : vector<8x128xf32>
    %26 = math.exp %25 : vector<8x128xf32>
    %cst_26 = arith.constant 1.000000e+00 : f32
    %27 = vector.broadcast %cst_26 : f32 to vector<8x128xf32>
    %28 = arith.addf %27, %26 : vector<8x128xf32>
    %29 = arith.divf %27, %28 : vector<8x128xf32>
    %30 = math.tanh %24 : vector<8x128xf32>
    %31 = vector.extract_strided_slice %29 {offsets = [0, 0], sizes = [8, 32], strides = [1, 1]} : vector<8x128xf32> to vector<8x32xf32>
    %32 = vector.extract_strided_slice %29 {offsets = [0, 32], sizes = [8, 32], strides = [1, 1]} : vector<8x128xf32> to vector<8x32xf32>
    %33 = vector.extract_strided_slice %30 {offsets = [0, 64], sizes = [8, 32], strides = [1, 1]} : vector<8x128xf32> to vector<8x32xf32>
    %34 = vector.extract_strided_slice %29 {offsets = [0, 96], sizes = [8, 32], strides = [1, 1]} : vector<8x128xf32> to vector<8x32xf32>
    %35 = arith.mulf %32, %13 : vector<8x32xf32>
    %36 = arith.mulf %31, %33 : vector<8x32xf32>
    %37 = arith.addf %35, %36 : vector<8x32xf32>
    %38 = math.tanh %37 : vector<8x32xf32>
    %39 = arith.mulf %34, %38 : vector<8x32xf32>
    %c0_27 = arith.constant 0 : index
    %c0_28 = arith.constant 0 : index
    %40 = vector.load %arg12[%c0_27, %c0_28] : memref<8x64xf32, #tpu.memory_space<vmem>>, vector<8x32xf32>
    tpu.vector_store %arg12[%c0_27, %c0_28], %39 {strides = array<i32>} : memref<8x64xf32, #tpu.memory_space<vmem>>, vector<8x32xf32>,
    %c0_29 = arith.constant 0 : index
    %c0_30 = arith.constant 0 : index
    %41 = vector.load %arg12[%c0_29, %c0_30] : memref<8x64xf32, #tpu.memory_space<vmem>>, vector<8x64xf32>
    %cst_31 = arith.constant dense<0.000000e+00> : vector<8x256xf32>
    %42 = tpu.matmul %41, %6, %cst_31 {dimension_numbers = #tpu.dot_dimension_numbers<[1], [0], [0], [1], [0, 0, 1, 1], [], []>} : vector<8x64xf32>, vector<64x256xf32>, vector<8x256xf32> -> vector<8x256xf32>
    %43 = vector.extract_strided_slice %42 {offsets = [0, 0], sizes = [8, 128], strides = [1, 1]} : vector<8x256xf32> to vector<8x128xf32>
    %44 = vector.extract_strided_slice %42 {offsets = [0, 128], sizes = [8, 128], strides = [1, 1]} : vector<8x256xf32> to vector<8x128xf32>
    %45 = arith.addf %44, %9 : vector<8x128xf32>
    %46 = arith.negf %45 : vector<8x128xf32>
    %47 = math.exp %46 : vector<8x128xf32>
    %cst_32 = arith.constant 1.000000e+00 : f32
    %48 = vector.broadcast %cst_32 : f32 to vector<8x128xf32>
    %49 = arith.addf %48, %47 : vector<8x128xf32>
    %50 = arith.divf %48, %49 : vector<8x128xf32>
    %51 = math.tanh %45 : vector<8x128xf32>
    %52 = vector.extract_strided_slice %50 {offsets = [0, 0], sizes = [8, 32], strides = [1, 1]} : vector<8x128xf32> to vector<8x32xf32>
    %53 = vector.extract_strided_slice %50 {offsets = [0, 32], sizes = [8, 32], strides = [1, 1]} : vector<8x128xf32> to vector<8x32xf32>
    %54 = vector.extract_strided_slice %51 {offsets = [0, 64], sizes = [8, 32], strides = [1, 1]} : vector<8x128xf32> to vector<8x32xf32>
    %55 = vector.extract_strided_slice %50 {offsets = [0, 96], sizes = [8, 32], strides = [1, 1]} : vector<8x128xf32> to vector<8x32xf32>
    %56 = arith.mulf %53, %17 : vector<8x32xf32>
    %57 = arith.mulf %52, %54 : vector<8x32xf32>
    %58 = arith.addf %56, %57 : vector<8x32xf32>
    %59 = math.tanh %58 : vector<8x32xf32>
    %60 = arith.mulf %55, %59 : vector<8x32xf32>
    %c0_33 = arith.constant 0 : index
    %c32_34 = arith.constant 32 : index
    %61 = vector.load %arg12[%c0_33, %c32_34] : memref<8x64xf32, #tpu.memory_space<vmem>>, vector<8x32xf32>
    tpu.vector_store %arg12[%c0_33, %c32_34], %60 {strides = array<i32>} : memref<8x64xf32, #tpu.memory_space<vmem>>, vector<8x32xf32>,
    %62 = vector.extract_strided_slice %5 {offsets = [8, 0], sizes = [8, 128], strides = [1, 1]} : vector<64x128xf32> to vector<8x128xf32>
    %63 = arith.addf %62, %43 : vector<8x128xf32>
    %64 = arith.negf %63 : vector<8x128xf32>
    %65 = math.exp %64 : vector<8x128xf32>
    %cst_35 = arith.constant 1.000000e+00 : f32
    %66 = vector.broadcast %cst_35 : f32 to vector<8x128xf32>
    %67 = arith.addf %66, %65 : vector<8x128xf32>
    %68 = arith.divf %66, %67 : vector<8x128xf32>
    %69 = math.tanh %63 : vector<8x128xf32>
    %70 = vector.extract_strided_slice %68 {offsets = [0, 0], sizes = [8, 32], strides = [1, 1]} : vector<8x128xf32> to vector<8x32xf32>
    %71 = vector.extract_strided_slice %68 {offsets = [0, 32], sizes = [8, 32], strides = [1, 1]} : vector<8x128xf32> to vector<8x32xf32>
    %72 = vector.extract_strided_slice %69 {offsets = [0, 64], sizes = [8, 32], strides = [1, 1]} : vector<8x128xf32> to vector<8x32xf32>
    %73 = vector.extract_strided_slice %68 {offsets = [0, 96], sizes = [8, 32], strides = [1, 1]} : vector<8x128xf32> to vector<8x32xf32>
    %74 = arith.mulf %71, %37 : vector<8x32xf32>
    %75 = arith.mulf %70, %72 : vector<8x32xf32>
    %76 = arith.addf %74, %75 : vector<8x32xf32>
    %77 = math.tanh %76 : vector<8x32xf32>
    %78 = arith.mulf %73, %77 : vector<8x32xf32>
    %c0_36 = arith.constant 0 : index
    %c0_37 = arith.constant 0 : index
    %79 = vector.load %arg12[%c0_36, %c0_37] : memref<8x64xf32, #tpu.memory_space<vmem>>, vector<8x32xf32>
    tpu.vector_store %arg12[%c0_36, %c0_37], %78 {strides = array<i32>} : memref<8x64xf32, #tpu.memory_space<vmem>>, vector<8x32xf32>,
    %c0_38 = arith.constant 0 : index
    %c0_39 = arith.constant 0 : index
    %80 = vector.load %arg12[%c0_38, %c0_39] : memref<8x64xf32, #tpu.memory_space<vmem>>, vector<8x64xf32>
    %cst_40 = arith.constant dense<0.000000e+00> : vector<8x256xf32>
    %81 = tpu.matmul %80, %6, %cst_40 {dimension_numbers = #tpu.dot_dimension_numbers<[1], [0], [0], [1], [0, 0, 1, 1], [], []>} : vector<8x64xf32>, vector<64x256xf32>, vector<8x256xf32> -> vector<8x256xf32>
    %82 = vector.extract_strided_slice %81 {offsets = [0, 0], sizes = [8, 128], strides = [1, 1]} : vector<8x256xf32> to vector<8x128xf32>
    %83 = vector.extract_strided_slice %81 {offsets = [0, 128], sizes = [8, 128], strides = [1, 1]} : vector<8x256xf32> to vector<8x128xf32>
    %84 = arith.addf %83, %9 : vector<8x128xf32>
    %85 = arith.negf %84 : vector<8x128xf32>
    %86 = math.exp %85 : vector<8x128xf32>
    %cst_41 = arith.constant 1.000000e+00 : f32
    %87 = vector.broadcast %cst_41 : f32 to vector<8x128xf32>
    %88 = arith.addf %87, %86 : vector<8x128xf32>
    %89 = arith.divf %87, %88 : vector<8x128xf32>
    %90 = math.tanh %84 : vector<8x128xf32>
    %91 = vector.extract_strided_slice %89 {offsets = [0, 0], sizes = [8, 32], strides = [1, 1]} : vector<8x128xf32> to vector<8x32xf32>
    %92 = vector.extract_strided_slice %89 {offsets = [0, 32], sizes = [8, 32], strides = [1, 1]} : vector<8x128xf32> to vector<8x32xf32>
    %93 = vector.extract_strided_slice %90 {offsets = [0, 64], sizes = [8, 32], strides = [1, 1]} : vector<8x128xf32> to vector<8x32xf32>
    %94 = vector.extract_strided_slice %89 {offsets = [0, 96], sizes = [8, 32], strides = [1, 1]} : vector<8x128xf32> to vector<8x32xf32>
    %95 = arith.mulf %92, %58 : vector<8x32xf32>
    %96 = arith.mulf %91, %93 : vector<8x32xf32>
    %97 = arith.addf %95, %96 : vector<8x32xf32>
    %98 = math.tanh %97 : vector<8x32xf32>
    %99 = arith.mulf %94, %98 : vector<8x32xf32>
    %c0_42 = arith.constant 0 : index
    %c32_43 = arith.constant 32 : index
    %100 = vector.load %arg12[%c0_42, %c32_43] : memref<8x64xf32, #tpu.memory_space<vmem>>, vector<8x32xf32>
    tpu.vector_store %arg12[%c0_42, %c32_43], %99 {strides = array<i32>} : memref<8x64xf32, #tpu.memory_space<vmem>>, vector<8x32xf32>,
    %101 = vector.extract_strided_slice %5 {offsets = [16, 0], sizes = [8, 128], strides = [1, 1]} : vector<64x128xf32> to vector<8x128xf32>
    %102 = arith.addf %101, %82 : vector<8x128xf32>
    %103 = arith.negf %102 : vector<8x128xf32>
    %104 = math.exp %103 : vector<8x128xf32>
    %cst_44 = arith.constant 1.000000e+00 : f32
    %105 = vector.broadcast %cst_44 : f32 to vector<8x128xf32>
    %106 = arith.addf %105, %104 : vector<8x128xf32>
    %107 = arith.divf %105, %106 : vector<8x128xf32>
    %108 = math.tanh %102 : vector<8x128xf32>
    %109 = vector.extract_strided_slice %107 {offsets = [0, 0], sizes = [8, 32], strides = [1, 1]} : vector<8x128xf32> to vector<8x32xf32>
    %110 = vector.extract_strided_slice %107 {offsets = [0, 32], sizes = [8, 32], strides = [1, 1]} : vector<8x128xf32> to vector<8x32xf32>
    %111 = vector.extract_strided_slice %108 {offsets = [0, 64], sizes = [8, 32], strides = [1, 1]} : vector<8x128xf32> to vector<8x32xf32>
    %112 = vector.extract_strided_slice %107 {offsets = [0, 96], sizes = [8, 32], strides = [1, 1]} : vector<8x128xf32> to vector<8x32xf32>
    %113 = arith.mulf %110, %76 : vector<8x32xf32>
    %114 = arith.mulf %109, %111 : vector<8x32xf32>
    %115 = arith.addf %113, %114 : vector<8x32xf32>
    %116 = math.tanh %115 : vector<8x32xf32>
    %117 = arith.mulf %112, %116 : vector<8x32xf32>
    %c0_45 = arith.constant 0 : index
    %c0_46 = arith.constant 0 : index
    %118 = vector.load %arg12[%c0_45, %c0_46] : memref<8x64xf32, #tpu.memory_space<vmem>>, vector<8x32xf32>
    tpu.vector_store %arg12[%c0_45, %c0_46], %117 {strides = array<i32>} : memref<8x64xf32, #tpu.memory_space<vmem>>, vector<8x32xf32>,
    %c0_47 = arith.constant 0 : index
    %c0_48 = arith.constant 0 : index
    %119 = vector.load %arg12[%c0_47, %c0_48] : memref<8x64xf32, #tpu.memory_space<vmem>>, vector<8x64xf32>
    %cst_49 = arith.constant dense<0.000000e+00> : vector<8x256xf32>
    %120 = tpu.matmul %119, %6, %cst_49 {dimension_numbers = #tpu.dot_dimension_numbers<[1], [0], [0], [1], [0, 0, 1, 1], [], []>} : vector<8x64xf32>, vector<64x256xf32>, vector<8x256xf32> -> vector<8x256xf32>
    %121 = vector.extract_strided_slice %120 {offsets = [0, 0], sizes = [8, 128], strides = [1, 1]} : vector<8x256xf32> to vector<8x128xf32>
    %122 = vector.extract_strided_slice %120 {offsets = [0, 128], sizes = [8, 128], strides = [1, 1]} : vector<8x256xf32> to vector<8x128xf32>
    %123 = arith.addf %122, %9 : vector<8x128xf32>
    %124 = arith.negf %123 : vector<8x128xf32>
    %125 = math.exp %124 : vector<8x128xf32>
    %cst_50 = arith.constant 1.000000e+00 : f32
    %126 = vector.broadcast %cst_50 : f32 to vector<8x128xf32>
    %127 = arith.addf %126, %125 : vector<8x128xf32>
    %128 = arith.divf %126, %127 : vector<8x128xf32>
    %129 = math.tanh %123 : vector<8x128xf32>
    %130 = vector.extract_strided_slice %128 {offsets = [0, 0], sizes = [8, 32], strides = [1, 1]} : vector<8x128xf32> to vector<8x32xf32>
    %131 = vector.extract_strided_slice %128 {offsets = [0, 32], sizes = [8, 32], strides = [1, 1]} : vector<8x128xf32> to vector<8x32xf32>
    %132 = vector.extract_strided_slice %129 {offsets = [0, 64], sizes = [8, 32], strides = [1, 1]} : vector<8x128xf32> to vector<8x32xf32>
    %133 = vector.extract_strided_slice %128 {offsets = [0, 96], sizes = [8, 32], strides = [1, 1]} : vector<8x128xf32> to vector<8x32xf32>
    %134 = arith.mulf %131, %97 : vector<8x32xf32>
    %135 = arith.mulf %130, %132 : vector<8x32xf32>
    %136 = arith.addf %134, %135 : vector<8x32xf32>
    %137 = math.tanh %136 : vector<8x32xf32>
    %138 = arith.mulf %133, %137 : vector<8x32xf32>
    %c0_51 = arith.constant 0 : index
    %c32_52 = arith.constant 32 : index
    %139 = vector.load %arg12[%c0_51, %c32_52] : memref<8x64xf32, #tpu.memory_space<vmem>>, vector<8x32xf32>
    tpu.vector_store %arg12[%c0_51, %c32_52], %138 {strides = array<i32>} : memref<8x64xf32, #tpu.memory_space<vmem>>, vector<8x32xf32>,
    %140 = vector.extract_strided_slice %5 {offsets = [24, 0], sizes = [8, 128], strides = [1, 1]} : vector<64x128xf32> to vector<8x128xf32>
    %141 = arith.addf %140, %121 : vector<8x128xf32>
    %142 = arith.negf %141 : vector<8x128xf32>
    %143 = math.exp %142 : vector<8x128xf32>
    %cst_53 = arith.constant 1.000000e+00 : f32
    %144 = vector.broadcast %cst_53 : f32 to vector<8x128xf32>
    %145 = arith.addf %144, %143 : vector<8x128xf32>
    %146 = arith.divf %144, %145 : vector<8x128xf32>
    %147 = math.tanh %141 : vector<8x128xf32>
    %148 = vector.extract_strided_slice %146 {offsets = [0, 0], sizes = [8, 32], strides = [1, 1]} : vector<8x128xf32> to vector<8x32xf32>
    %149 = vector.extract_strided_slice %146 {offsets = [0, 32], sizes = [8, 32], strides = [1, 1]} : vector<8x128xf32> to vector<8x32xf32>
    %150 = vector.extract_strided_slice %147 {offsets = [0, 64], sizes = [8, 32], strides = [1, 1]} : vector<8x128xf32> to vector<8x32xf32>
    %151 = vector.extract_strided_slice %146 {offsets = [0, 96], sizes = [8, 32], strides = [1, 1]} : vector<8x128xf32> to vector<8x32xf32>
    %152 = arith.mulf %149, %115 : vector<8x32xf32>
    %153 = arith.mulf %148, %150 : vector<8x32xf32>
    %154 = arith.addf %152, %153 : vector<8x32xf32>
    %155 = math.tanh %154 : vector<8x32xf32>
    %156 = arith.mulf %151, %155 : vector<8x32xf32>
    %c0_54 = arith.constant 0 : index
    %c0_55 = arith.constant 0 : index
    %157 = vector.load %arg12[%c0_54, %c0_55] : memref<8x64xf32, #tpu.memory_space<vmem>>, vector<8x32xf32>
    tpu.vector_store %arg12[%c0_54, %c0_55], %156 {strides = array<i32>} : memref<8x64xf32, #tpu.memory_space<vmem>>, vector<8x32xf32>,
    %c0_56 = arith.constant 0 : index
    %c0_57 = arith.constant 0 : index
    %158 = vector.load %arg12[%c0_56, %c0_57] : memref<8x64xf32, #tpu.memory_space<vmem>>, vector<8x64xf32>
    %cst_58 = arith.constant dense<0.000000e+00> : vector<8x256xf32>
    %159 = tpu.matmul %158, %6, %cst_58 {dimension_numbers = #tpu.dot_dimension_numbers<[1], [0], [0], [1], [0, 0, 1, 1], [], []>} : vector<8x64xf32>, vector<64x256xf32>, vector<8x256xf32> -> vector<8x256xf32>
    %160 = vector.extract_strided_slice %159 {offsets = [0, 0], sizes = [8, 128], strides = [1, 1]} : vector<8x256xf32> to vector<8x128xf32>
    %161 = vector.extract_strided_slice %159 {offsets = [0, 128], sizes = [8, 128], strides = [1, 1]} : vector<8x256xf32> to vector<8x128xf32>
    %162 = arith.addf %161, %9 : vector<8x128xf32>
    %163 = arith.negf %162 : vector<8x128xf32>
    %164 = math.exp %163 : vector<8x128xf32>
    %cst_59 = arith.constant 1.000000e+00 : f32
    %165 = vector.broadcast %cst_59 : f32 to vector<8x128xf32>
    %166 = arith.addf %165, %164 : vector<8x128xf32>
    %167 = arith.divf %165, %166 : vector<8x128xf32>
    %168 = math.tanh %162 : vector<8x128xf32>
    %169 = vector.extract_strided_slice %167 {offsets = [0, 0], sizes = [8, 32], strides = [1, 1]} : vector<8x128xf32> to vector<8x32xf32>
    %170 = vector.extract_strided_slice %167 {offsets = [0, 32], sizes = [8, 32], strides = [1, 1]} : vector<8x128xf32> to vector<8x32xf32>
    %171 = vector.extract_strided_slice %168 {offsets = [0, 64], sizes = [8, 32], strides = [1, 1]} : vector<8x128xf32> to vector<8x32xf32>
    %172 = vector.extract_strided_slice %167 {offsets = [0, 96], sizes = [8, 32], strides = [1, 1]} : vector<8x128xf32> to vector<8x32xf32>
    %173 = arith.mulf %170, %136 : vector<8x32xf32>
    %174 = arith.mulf %169, %171 : vector<8x32xf32>
    %175 = arith.addf %173, %174 : vector<8x32xf32>
    %176 = math.tanh %175 : vector<8x32xf32>
    %177 = arith.mulf %172, %176 : vector<8x32xf32>
    %c0_60 = arith.constant 0 : index
    %c32_61 = arith.constant 32 : index
    %178 = vector.load %arg12[%c0_60, %c32_61] : memref<8x64xf32, #tpu.memory_space<vmem>>, vector<8x32xf32>
    tpu.vector_store %arg12[%c0_60, %c32_61], %177 {strides = array<i32>} : memref<8x64xf32, #tpu.memory_space<vmem>>, vector<8x32xf32>,
    %179 = vector.extract_strided_slice %5 {offsets = [32, 0], sizes = [8, 128], strides = [1, 1]} : vector<64x128xf32> to vector<8x128xf32>
    %180 = arith.addf %179, %160 : vector<8x128xf32>
    %181 = arith.negf %180 : vector<8x128xf32>
    %182 = math.exp %181 : vector<8x128xf32>
    %cst_62 = arith.constant 1.000000e+00 : f32
    %183 = vector.broadcast %cst_62 : f32 to vector<8x128xf32>
    %184 = arith.addf %183, %182 : vector<8x128xf32>
    %185 = arith.divf %183, %184 : vector<8x128xf32>
    %186 = math.tanh %180 : vector<8x128xf32>
    %187 = vector.extract_strided_slice %185 {offsets = [0, 0], sizes = [8, 32], strides = [1, 1]} : vector<8x128xf32> to vector<8x32xf32>
    %188 = vector.extract_strided_slice %185 {offsets = [0, 32], sizes = [8, 32], strides = [1, 1]} : vector<8x128xf32> to vector<8x32xf32>
    %189 = vector.extract_strided_slice %186 {offsets = [0, 64], sizes = [8, 32], strides = [1, 1]} : vector<8x128xf32> to vector<8x32xf32>
    %190 = vector.extract_strided_slice %185 {offsets = [0, 96], sizes = [8, 32], strides = [1, 1]} : vector<8x128xf32> to vector<8x32xf32>
    %191 = arith.mulf %188, %154 : vector<8x32xf32>
    %192 = arith.mulf %187, %189 : vector<8x32xf32>
    %193 = arith.addf %191, %192 : vector<8x32xf32>
    %194 = math.tanh %193 : vector<8x32xf32>
    %195 = arith.mulf %190, %194 : vector<8x32xf32>
    %c0_63 = arith.constant 0 : index
    %c0_64 = arith.constant 0 : index
    %196 = vector.load %arg12[%c0_63, %c0_64] : memref<8x64xf32, #tpu.memory_space<vmem>>, vector<8x32xf32>
    tpu.vector_store %arg12[%c0_63, %c0_64], %195 {strides = array<i32>} : memref<8x64xf32, #tpu.memory_space<vmem>>, vector<8x32xf32>,
    %c0_65 = arith.constant 0 : index
    %c0_66 = arith.constant 0 : index
    %197 = vector.load %arg12[%c0_65, %c0_66] : memref<8x64xf32, #tpu.memory_space<vmem>>, vector<8x64xf32>
    %cst_67 = arith.constant dense<0.000000e+00> : vector<8x256xf32>
    %198 = tpu.matmul %197, %6, %cst_67 {dimension_numbers = #tpu.dot_dimension_numbers<[1], [0], [0], [1], [0, 0, 1, 1], [], []>} : vector<8x64xf32>, vector<64x256xf32>, vector<8x256xf32> -> vector<8x256xf32>
    %199 = vector.extract_strided_slice %198 {offsets = [0, 0], sizes = [8, 128], strides = [1, 1]} : vector<8x256xf32> to vector<8x128xf32>
    %200 = vector.extract_strided_slice %198 {offsets = [0, 128], sizes = [8, 128], strides = [1, 1]} : vector<8x256xf32> to vector<8x128xf32>
    %201 = arith.addf %200, %9 : vector<8x128xf32>
    %202 = arith.negf %201 : vector<8x128xf32>
    %203 = math.exp %202 : vector<8x128xf32>
    %cst_68 = arith.constant 1.000000e+00 : f32
    %204 = vector.broadcast %cst_68 : f32 to vector<8x128xf32>
    %205 = arith.addf %204, %203 : vector<8x128xf32>
    %206 = arith.divf %204, %205 : vector<8x128xf32>
    %207 = math.tanh %201 : vector<8x128xf32>
    %208 = vector.extract_strided_slice %206 {offsets = [0, 0], sizes = [8, 32], strides = [1, 1]} : vector<8x128xf32> to vector<8x32xf32>
    %209 = vector.extract_strided_slice %206 {offsets = [0, 32], sizes = [8, 32], strides = [1, 1]} : vector<8x128xf32> to vector<8x32xf32>
    %210 = vector.extract_strided_slice %207 {offsets = [0, 64], sizes = [8, 32], strides = [1, 1]} : vector<8x128xf32> to vector<8x32xf32>
    %211 = vector.extract_strided_slice %206 {offsets = [0, 96], sizes = [8, 32], strides = [1, 1]} : vector<8x128xf32> to vector<8x32xf32>
    %212 = arith.mulf %209, %175 : vector<8x32xf32>
    %213 = arith.mulf %208, %210 : vector<8x32xf32>
    %214 = arith.addf %212, %213 : vector<8x32xf32>
    %215 = math.tanh %214 : vector<8x32xf32>
    %216 = arith.mulf %211, %215 : vector<8x32xf32>
    %c0_69 = arith.constant 0 : index
    %c32_70 = arith.constant 32 : index
    %217 = vector.load %arg12[%c0_69, %c32_70] : memref<8x64xf32, #tpu.memory_space<vmem>>, vector<8x32xf32>
    tpu.vector_store %arg12[%c0_69, %c32_70], %216 {strides = array<i32>} : memref<8x64xf32, #tpu.memory_space<vmem>>, vector<8x32xf32>,
    %218 = vector.extract_strided_slice %5 {offsets = [40, 0], sizes = [8, 128], strides = [1, 1]} : vector<64x128xf32> to vector<8x128xf32>
    %219 = arith.addf %218, %199 : vector<8x128xf32>
    %220 = arith.negf %219 : vector<8x128xf32>
    %221 = math.exp %220 : vector<8x128xf32>
    %cst_71 = arith.constant 1.000000e+00 : f32
    %222 = vector.broadcast %cst_71 : f32 to vector<8x128xf32>
    %223 = arith.addf %222, %221 : vector<8x128xf32>
    %224 = arith.divf %222, %223 : vector<8x128xf32>
    %225 = math.tanh %219 : vector<8x128xf32>
    %226 = vector.extract_strided_slice %224 {offsets = [0, 0], sizes = [8, 32], strides = [1, 1]} : vector<8x128xf32> to vector<8x32xf32>
    %227 = vector.extract_strided_slice %224 {offsets = [0, 32], sizes = [8, 32], strides = [1, 1]} : vector<8x128xf32> to vector<8x32xf32>
    %228 = vector.extract_strided_slice %225 {offsets = [0, 64], sizes = [8, 32], strides = [1, 1]} : vector<8x128xf32> to vector<8x32xf32>
    %229 = vector.extract_strided_slice %224 {offsets = [0, 96], sizes = [8, 32], strides = [1, 1]} : vector<8x128xf32> to vector<8x32xf32>
    %230 = arith.mulf %227, %193 : vector<8x32xf32>
    %231 = arith.mulf %226, %228 : vector<8x32xf32>
    %232 = arith.addf %230, %231 : vector<8x32xf32>
    %233 = math.tanh %232 : vector<8x32xf32>
    %234 = arith.mulf %229, %233 : vector<8x32xf32>
    %c0_72 = arith.constant 0 : index
    %c0_73 = arith.constant 0 : index
    %235 = vector.load %arg12[%c0_72, %c0_73] : memref<8x64xf32, #tpu.memory_space<vmem>>, vector<8x32xf32>
    tpu.vector_store %arg12[%c0_72, %c0_73], %234 {strides = array<i32>} : memref<8x64xf32, #tpu.memory_space<vmem>>, vector<8x32xf32>,
    %c0_74 = arith.constant 0 : index
    %c0_75 = arith.constant 0 : index
    %236 = vector.load %arg12[%c0_74, %c0_75] : memref<8x64xf32, #tpu.memory_space<vmem>>, vector<8x64xf32>
    %cst_76 = arith.constant dense<0.000000e+00> : vector<8x256xf32>
    %237 = tpu.matmul %236, %6, %cst_76 {dimension_numbers = #tpu.dot_dimension_numbers<[1], [0], [0], [1], [0, 0, 1, 1], [], []>} : vector<8x64xf32>, vector<64x256xf32>, vector<8x256xf32> -> vector<8x256xf32>
    %238 = vector.extract_strided_slice %237 {offsets = [0, 0], sizes = [8, 128], strides = [1, 1]} : vector<8x256xf32> to vector<8x128xf32>
    %239 = vector.extract_strided_slice %237 {offsets = [0, 128], sizes = [8, 128], strides = [1, 1]} : vector<8x256xf32> to vector<8x128xf32>
    %240 = arith.addf %239, %9 : vector<8x128xf32>
    %241 = arith.negf %240 : vector<8x128xf32>
    %242 = math.exp %241 : vector<8x128xf32>
    %cst_77 = arith.constant 1.000000e+00 : f32
    %243 = vector.broadcast %cst_77 : f32 to vector<8x128xf32>
    %244 = arith.addf %243, %242 : vector<8x128xf32>
    %245 = arith.divf %243, %244 : vector<8x128xf32>
    %246 = math.tanh %240 : vector<8x128xf32>
    %247 = vector.extract_strided_slice %245 {offsets = [0, 0], sizes = [8, 32], strides = [1, 1]} : vector<8x128xf32> to vector<8x32xf32>
    %248 = vector.extract_strided_slice %245 {offsets = [0, 32], sizes = [8, 32], strides = [1, 1]} : vector<8x128xf32> to vector<8x32xf32>
    %249 = vector.extract_strided_slice %246 {offsets = [0, 64], sizes = [8, 32], strides = [1, 1]} : vector<8x128xf32> to vector<8x32xf32>
    %250 = vector.extract_strided_slice %245 {offsets = [0, 96], sizes = [8, 32], strides = [1, 1]} : vector<8x128xf32> to vector<8x32xf32>
    %251 = arith.mulf %248, %214 : vector<8x32xf32>
    %252 = arith.mulf %247, %249 : vector<8x32xf32>
    %253 = arith.addf %251, %252 : vector<8x32xf32>
    %254 = math.tanh %253 : vector<8x32xf32>
    %255 = arith.mulf %250, %254 : vector<8x32xf32>
    %c0_78 = arith.constant 0 : index
    %c32_79 = arith.constant 32 : index
    %256 = vector.load %arg12[%c0_78, %c32_79] : memref<8x64xf32, #tpu.memory_space<vmem>>, vector<8x32xf32>
    tpu.vector_store %arg12[%c0_78, %c32_79], %255 {strides = array<i32>} : memref<8x64xf32, #tpu.memory_space<vmem>>, vector<8x32xf32>,
    %257 = vector.extract_strided_slice %5 {offsets = [48, 0], sizes = [8, 128], strides = [1, 1]} : vector<64x128xf32> to vector<8x128xf32>
    %258 = arith.addf %257, %238 : vector<8x128xf32>
    %259 = arith.negf %258 : vector<8x128xf32>
    %260 = math.exp %259 : vector<8x128xf32>
    %cst_80 = arith.constant 1.000000e+00 : f32
    %261 = vector.broadcast %cst_80 : f32 to vector<8x128xf32>
    %262 = arith.addf %261, %260 : vector<8x128xf32>
    %263 = arith.divf %261, %262 : vector<8x128xf32>
    %264 = math.tanh %258 : vector<8x128xf32>
    %265 = vector.extract_strided_slice %263 {offsets = [0, 0], sizes = [8, 32], strides = [1, 1]} : vector<8x128xf32> to vector<8x32xf32>
    %266 = vector.extract_strided_slice %263 {offsets = [0, 32], sizes = [8, 32], strides = [1, 1]} : vector<8x128xf32> to vector<8x32xf32>
    %267 = vector.extract_strided_slice %264 {offsets = [0, 64], sizes = [8, 32], strides = [1, 1]} : vector<8x128xf32> to vector<8x32xf32>
    %268 = vector.extract_strided_slice %263 {offsets = [0, 96], sizes = [8, 32], strides = [1, 1]} : vector<8x128xf32> to vector<8x32xf32>
    %269 = arith.mulf %266, %232 : vector<8x32xf32>
    %270 = arith.mulf %265, %267 : vector<8x32xf32>
    %271 = arith.addf %269, %270 : vector<8x32xf32>
    %272 = math.tanh %271 : vector<8x32xf32>
    %273 = arith.mulf %268, %272 : vector<8x32xf32>
    %c0_81 = arith.constant 0 : index
    %c0_82 = arith.constant 0 : index
    %274 = vector.load %arg12[%c0_81, %c0_82] : memref<8x64xf32, #tpu.memory_space<vmem>>, vector<8x32xf32>
    tpu.vector_store %arg12[%c0_81, %c0_82], %273 {strides = array<i32>} : memref<8x64xf32, #tpu.memory_space<vmem>>, vector<8x32xf32>,
    %c0_83 = arith.constant 0 : index
    %c0_84 = arith.constant 0 : index
    %275 = vector.load %arg12[%c0_83, %c0_84] : memref<8x64xf32, #tpu.memory_space<vmem>>, vector<8x64xf32>
    %cst_85 = arith.constant dense<0.000000e+00> : vector<8x256xf32>
    %276 = tpu.matmul %275, %6, %cst_85 {dimension_numbers = #tpu.dot_dimension_numbers<[1], [0], [0], [1], [0, 0, 1, 1], [], []>} : vector<8x64xf32>, vector<64x256xf32>, vector<8x256xf32> -> vector<8x256xf32>
    %277 = vector.extract_strided_slice %276 {offsets = [0, 0], sizes = [8, 128], strides = [1, 1]} : vector<8x256xf32> to vector<8x128xf32>
    %278 = vector.extract_strided_slice %276 {offsets = [0, 128], sizes = [8, 128], strides = [1, 1]} : vector<8x256xf32> to vector<8x128xf32>
    %279 = arith.addf %278, %9 : vector<8x128xf32>
    %280 = arith.negf %279 : vector<8x128xf32>
    %281 = math.exp %280 : vector<8x128xf32>
    %cst_86 = arith.constant 1.000000e+00 : f32
    %282 = vector.broadcast %cst_86 : f32 to vector<8x128xf32>
    %283 = arith.addf %282, %281 : vector<8x128xf32>
    %284 = arith.divf %282, %283 : vector<8x128xf32>
    %285 = math.tanh %279 : vector<8x128xf32>
    %286 = vector.extract_strided_slice %284 {offsets = [0, 0], sizes = [8, 32], strides = [1, 1]} : vector<8x128xf32> to vector<8x32xf32>
    %287 = vector.extract_strided_slice %284 {offsets = [0, 32], sizes = [8, 32], strides = [1, 1]} : vector<8x128xf32> to vector<8x32xf32>
    %288 = vector.extract_strided_slice %285 {offsets = [0, 64], sizes = [8, 32], strides = [1, 1]} : vector<8x128xf32> to vector<8x32xf32>
    %289 = vector.extract_strided_slice %284 {offsets = [0, 96], sizes = [8, 32], strides = [1, 1]} : vector<8x128xf32> to vector<8x32xf32>
    %290 = arith.mulf %287, %253 : vector<8x32xf32>
    %291 = arith.mulf %286, %288 : vector<8x32xf32>
    %292 = arith.addf %290, %291 : vector<8x32xf32>
    %293 = math.tanh %292 : vector<8x32xf32>
    %294 = arith.mulf %289, %293 : vector<8x32xf32>
    %c0_87 = arith.constant 0 : index
    %c32_88 = arith.constant 32 : index
    %295 = vector.load %arg12[%c0_87, %c32_88] : memref<8x64xf32, #tpu.memory_space<vmem>>, vector<8x32xf32>
    tpu.vector_store %arg12[%c0_87, %c32_88], %294 {strides = array<i32>} : memref<8x64xf32, #tpu.memory_space<vmem>>, vector<8x32xf32>,
    %296 = vector.extract_strided_slice %5 {offsets = [56, 0], sizes = [8, 128], strides = [1, 1]} : vector<64x128xf32> to vector<8x128xf32>
    %297 = arith.addf %296, %277 : vector<8x128xf32>
    %298 = arith.negf %297 : vector<8x128xf32>
    %299 = math.exp %298 : vector<8x128xf32>
    %cst_89 = arith.constant 1.000000e+00 : f32
    %300 = vector.broadcast %cst_89 : f32 to vector<8x128xf32>
    %301 = arith.addf %300, %299 : vector<8x128xf32>
    %302 = arith.divf %300, %301 : vector<8x128xf32>
    %303 = math.tanh %297 : vector<8x128xf32>
    %304 = vector.extract_strided_slice %302 {offsets = [0, 0], sizes = [8, 32], strides = [1, 1]} : vector<8x128xf32> to vector<8x32xf32>
    %305 = vector.extract_strided_slice %302 {offsets = [0, 32], sizes = [8, 32], strides = [1, 1]} : vector<8x128xf32> to vector<8x32xf32>
    %306 = vector.extract_strided_slice %303 {offsets = [0, 64], sizes = [8, 32], strides = [1, 1]} : vector<8x128xf32> to vector<8x32xf32>
    %307 = vector.extract_strided_slice %302 {offsets = [0, 96], sizes = [8, 32], strides = [1, 1]} : vector<8x128xf32> to vector<8x32xf32>
    %308 = arith.mulf %305, %271 : vector<8x32xf32>
    %309 = arith.mulf %304, %306 : vector<8x32xf32>
    %310 = arith.addf %308, %309 : vector<8x32xf32>
    %311 = math.tanh %310 : vector<8x32xf32>
    %312 = arith.mulf %307, %311 : vector<8x32xf32>
    %c0_90 = arith.constant 0 : index
    %c0_91 = arith.constant 0 : index
    %313 = vector.load %arg12[%c0_90, %c0_91] : memref<8x64xf32, #tpu.memory_space<vmem>>, vector<8x32xf32>
    tpu.vector_store %arg12[%c0_90, %c0_91], %312 {strides = array<i32>} : memref<8x64xf32, #tpu.memory_space<vmem>>, vector<8x32xf32>,
    %c0_92 = arith.constant 0 : index
    %c0_93 = arith.constant 0 : index
    %314 = vector.load %arg12[%c0_92, %c0_93] : memref<8x64xf32, #tpu.memory_space<vmem>>, vector<8x64xf32>
    %cst_94 = arith.constant dense<0.000000e+00> : vector<8x256xf32>
    %315 = tpu.matmul %314, %6, %cst_94 {dimension_numbers = #tpu.dot_dimension_numbers<[1], [0], [0], [1], [0, 0, 1, 1], [], []>} : vector<8x64xf32>, vector<64x256xf32>, vector<8x256xf32> -> vector<8x256xf32>
    %316 = vector.extract_strided_slice %315 {offsets = [0, 128], sizes = [8, 128], strides = [1, 1]} : vector<8x256xf32> to vector<8x128xf32>
    %317 = arith.addf %316, %9 : vector<8x128xf32>
    %318 = arith.negf %317 : vector<8x128xf32>
    %319 = math.exp %318 : vector<8x128xf32>
    %cst_95 = arith.constant 1.000000e+00 : f32
    %320 = vector.broadcast %cst_95 : f32 to vector<8x128xf32>
    %321 = arith.addf %320, %319 : vector<8x128xf32>
    %322 = arith.divf %320, %321 : vector<8x128xf32>
    %323 = math.tanh %317 : vector<8x128xf32>
    %324 = vector.extract_strided_slice %322 {offsets = [0, 0], sizes = [8, 32], strides = [1, 1]} : vector<8x128xf32> to vector<8x32xf32>
    %325 = vector.extract_strided_slice %322 {offsets = [0, 32], sizes = [8, 32], strides = [1, 1]} : vector<8x128xf32> to vector<8x32xf32>
    %326 = vector.extract_strided_slice %323 {offsets = [0, 64], sizes = [8, 32], strides = [1, 1]} : vector<8x128xf32> to vector<8x32xf32>
    %327 = vector.extract_strided_slice %322 {offsets = [0, 96], sizes = [8, 32], strides = [1, 1]} : vector<8x128xf32> to vector<8x32xf32>
    %328 = arith.mulf %325, %292 : vector<8x32xf32>
    %329 = arith.mulf %324, %326 : vector<8x32xf32>
    %330 = arith.addf %328, %329 : vector<8x32xf32>
    %331 = math.tanh %330 : vector<8x32xf32>
    %332 = arith.mulf %327, %331 : vector<8x32xf32>
    %c0_96 = arith.constant 0 : index
    %c32_97 = arith.constant 32 : index
    %333 = vector.load %arg12[%c0_96, %c32_97] : memref<8x64xf32, #tpu.memory_space<vmem>>, vector<8x32xf32>
    tpu.vector_store %arg12[%c0_96, %c32_97], %332 {strides = array<i32>} : memref<8x64xf32, #tpu.memory_space<vmem>>, vector<8x32xf32>,
    %c0_98 = arith.constant 0 : index
    %c0_99 = arith.constant 0 : index
    %334 = vector.load %arg5[%c0_98, %c0_99] : memref<32x5xf32, #tpu.memory_space<vmem>>, vector<32x5xf32>
    %cst_100 = arith.constant dense<0.000000e+00> : vector<8x5xf32>
    %335 = tpu.matmul %332, %334, %cst_100 {dimension_numbers = #tpu.dot_dimension_numbers<[1], [0], [0], [1], [0, 0, 1, 1], [], []>} : vector<8x32xf32>, vector<32x5xf32>, vector<8x5xf32> -> vector<8x5xf32>
    %c0_101 = arith.constant 0 : index
    %c0_102 = arith.constant 0 : index
    %336 = vector.load %arg6[%c0_101, %c0_102] : memref<1x5xf32, #tpu.memory_space<vmem>>, vector<1x5xf32>
    %337 = vector.broadcast %336 : vector<1x5xf32> to vector<8x5xf32>
    %338 = arith.addf %335, %337 : vector<8x5xf32>
    %c0_103 = arith.constant 0 : index
    %c0_104 = arith.constant 0 : index
    %339 = vector.load %arg9[%c0_103, %c0_104] : memref<8x5xf32, #tpu.memory_space<vmem>>, vector<8x5xf32>
    tpu.vector_store %arg9[%c0_103, %c0_104], %338 {strides = array<i32>} : memref<8x5xf32, #tpu.memory_space<vmem>>, vector<8x5xf32>,
    %c0_105 = arith.constant 0 : index
    %c0_106 = arith.constant 0 : index
    %c0_107 = arith.constant 0 : index
    %340 = vector.load %arg10[%c0_105, %c0_106, %c0_107] : memref<2x8x32xf32, #tpu.memory_space<vmem>>, vector<1x8x32xf32>
    %341 = vector.shape_cast %340 : vector<1x8x32xf32> to vector<8x32xf32>
    %342 = vector.shape_cast %312 : vector<8x32xf32> to vector<1x8x32xf32>
    tpu.vector_store %arg10[%c0_105, %c0_106, %c0_107], %342 {strides = array<i32>} : memref<2x8x32xf32, #tpu.memory_space<vmem>>, vector<1x8x32xf32>,
    %c1_108 = arith.constant 1 : index
    %c0_109 = arith.constant 0 : index
    %c0_110 = arith.constant 0 : index
    %343 = vector.load %arg10[%c1_108, %c0_109, %c0_110] : memref<2x8x32xf32, #tpu.memory_space<vmem>>, vector<1x8x32xf32>
    %344 = vector.shape_cast %343 : vector<1x8x32xf32> to vector<8x32xf32>
    %345 = vector.shape_cast %332 : vector<8x32xf32> to vector<1x8x32xf32>
    tpu.vector_store %arg10[%c1_108, %c0_109, %c0_110], %345 {strides = array<i32>} : memref<2x8x32xf32, #tpu.memory_space<vmem>>, vector<1x8x32xf32>,
    %c0_111 = arith.constant 0 : index
    %c0_112 = arith.constant 0 : index
    %c0_113 = arith.constant 0 : index
    %346 = vector.load %arg11[%c0_111, %c0_112, %c0_113] : memref<2x8x32xf32, #tpu.memory_space<vmem>>, vector<1x8x32xf32>
    %347 = vector.shape_cast %346 : vector<1x8x32xf32> to vector<8x32xf32>
    %348 = vector.shape_cast %310 : vector<8x32xf32> to vector<1x8x32xf32>
    tpu.vector_store %arg11[%c0_111, %c0_112, %c0_113], %348 {strides = array<i32>} : memref<2x8x32xf32, #tpu.memory_space<vmem>>, vector<1x8x32xf32>,
    %c1_114 = arith.constant 1 : index
    %c0_115 = arith.constant 0 : index
    %c0_116 = arith.constant 0 : index
    %349 = vector.load %arg11[%c1_114, %c0_115, %c0_116] : memref<2x8x32xf32, #tpu.memory_space<vmem>>, vector<1x8x32xf32>
    %350 = vector.shape_cast %349 : vector<1x8x32xf32> to vector<8x32xf32>
    %351 = vector.shape_cast %330 : vector<8x32xf32> to vector<1x8x32xf32>
    tpu.vector_store %arg11[%c1_114, %c0_115, %c0_116], %351 {strides = array<i32>} : memref<2x8x32xf32, #tpu.memory_space<vmem>>, vector<1x8x32xf32>,
    return
  }
}

</mosaic_0001>

<llo_original>
// kernel: stock_rnn_forward.1
$region0: #{stock_rnn_forward.1}
  #allocation0 [shape = 'u32[]', space=smem, size = 0x4, offset = 0x4, fixed_abs, tag = 'smem constant byte address 0x4 - core index']
  #allocation1 [shape = 'u32[144,128]{1,0:T(1,128)}', space=vmem, size = 0x12000, scoped, tag = 'internal scratch']
  #allocation2 [shape = 'f32[8,64]{1,0:T(8,128)}', space=vmem, size = 0x1000, scoped, tag = 'scratch operand']
  %s0 = inlined_call_operand.vmem [shape: f32[64,8], index: 0, kind: input, shape index: {}]
  %s1 = inlined_call_operand.vmem [shape: f32[8,128], index: 1, kind: input, shape index: {}]
  %s2 = inlined_call_operand.vmem [shape: f32[1,128], index: 2, kind: input, shape index: {}]
  %s3 = inlined_call_operand.vmem [shape: f32[64,256], index: 3, kind: input, shape index: {}]
  %s4 = inlined_call_operand.vmem [shape: f32[1,128], index: 4, kind: input, shape index: {}]
  %s5 = inlined_call_operand.vmem [shape: f32[32,5], index: 5, kind: input, shape index: {}]
  %s6 = inlined_call_operand.vmem [shape: f32[1,5], index: 6, kind: input, shape index: {}]
  %s7 = inlined_call_operand.vmem [shape: f32[2,8,32], index: 7, kind: input, shape index: {}]
  %s8 = inlined_call_operand.vmem [shape: f32[2,8,32], index: 8, kind: input, shape index: {}]
  %s9 = inlined_call_operand.vmem [shape: f32[8,5], index: 9, kind: output, shape index: {0}]
  %s10 = inlined_call_operand.vmem [shape: f32[2,8,32], index: 10, kind: output, shape index: {1}]
  %s11 = inlined_call_operand.vmem [shape: f32[2,8,32], index: 11, kind: output, shape index: {2}]
  %12 = xla_tuple %s9, %s10, %s11
  %s13 = sld [smem:[#allocation0]]
  $region62: #{stock_rnn_forward.1} parent=0
    _
  %s15 = ssub.s32 1, %s13
  %s16 = scalar_select 0, %s15, %s13
  // Predicated region
  $region2: #{stock_rnn_forward.1} parent=0 // pred_check
    _
  $region3: #{stock_rnn_forward.1} parent=0 // pred_check_branch
    %18 = sbr.rel (0) target = $region5
  $region4: #{stock_rnn_forward.1} parent=0 // pred_region
    _
  $region5: #{stock_rnn_forward.1} parent=0 // pred_fallthru
    _
  // Predicated region
  $region6: #{stock_rnn_forward.1} parent=0 // pred_check
    _
  $region7: #{stock_rnn_forward.1} parent=0 // pred_check_branch
    %20 = sbr.rel (0) target = $region9
  $region8: #{stock_rnn_forward.1} parent=0 // pred_region
    _
  $region9: #{stock_rnn_forward.1} parent=0 // pred_fallthru
    _
  // Predicated region
  $region10: #{stock_rnn_forward.1} parent=0 // pred_check
    _
  $region11: #{stock_rnn_forward.1} parent=0 // pred_check_branch
    %22 = sbr.rel (0) target = $region13
  $region12: #{stock_rnn_forward.1} parent=0 // pred_region
    _
  $region13: #{stock_rnn_forward.1} parent=0 // pred_fallthru
    _
  // Predicated region
  $region14: #{stock_rnn_forward.1} parent=0 // pred_check
    _
  $region15: #{stock_rnn_forward.1} parent=0 // pred_check_branch
    %24 = sbr.rel (0) target = $region17
  $region16: #{stock_rnn_forward.1} parent=0 // pred_region
    _
  $region17: #{stock_rnn_forward.1} parent=0 // pred_fallthru
    _
  // Predicated region
  $region18: #{stock_rnn_forward.1} parent=0 // pred_check
    _
  $region19: #{stock_rnn_forward.1} parent=0 // pred_check_branch
    %26 = sbr.rel (0) target = $region21
  $region20: #{stock_rnn_forward.1} parent=0 // pred_region
    _
  $region21: #{stock_rnn_forward.1} parent=0 // pred_fallthru
    _
  // Predicated region
  $region22: #{stock_rnn_forward.1} parent=0 // pred_check
    _
  $region23: #{stock_rnn_forward.1} parent=0 // pred_check_branch
    %28 = sbr.rel (0) target = $region25
  $region24: #{stock_rnn_forward.1} parent=0 // pred_region
    _
  $region25: #{stock_rnn_forward.1} parent=0 // pred_fallthru
    _
  // Predicated region
  $region26: #{stock_rnn_forward.1} parent=0 // pred_check
    _
  $region27: #{stock_rnn_forward.1} parent=0 // pred_check_branch
    %30 = sbr.rel (0) target = $region29
  $region28: #{stock_rnn_forward.1} parent=0 // pred_region
    _
  $region29: #{stock_rnn_forward.1} parent=0 // pred_fallthru
    _
  // Predicated region
  $region30: #{stock_rnn_forward.1} parent=0 // pred_check
    _
  $region31: #{stock_rnn_forward.1} parent=0 // pred_check_branch
    %32 = sbr.rel (0) target = $region33
  $region32: #{stock_rnn_forward.1} parent=0 // pred_region
    _
  $region33: #{stock_rnn_forward.1} parent=0 // pred_fallthru
    _
  // Predicated region
  $region34: #{stock_rnn_forward.1} parent=0 // pred_check
    _
  $region35: #{stock_rnn_forward.1} parent=0 // pred_check_branch
    %34 = sbr.rel (0) target = $region37
  $region36: #{stock_rnn_forward.1} parent=0 // pred_region
    _
  $region37: #{stock_rnn_forward.1} parent=0 // pred_fallthru
    _
  %v35 = vld [vmem:[%s0] sm:$0xff]
  %v36 = vld [vmem:[%s0 + $0x8] sm:$0xff]
  %v37 = vld [vmem:[%s0 + $0x10] sm:$0xff]
  %v38 = vld [vmem:[%s0 + $0x18] sm:$0xff]
  %v39 = vld [vmem:[%s0 + $0x20] sm:$0xff]
  %v40 = vld [vmem:[%s0 + $0x28] sm:$0xff]
  %v41 = vld [vmem:[%s0 + $0x30] sm:$0xff]
  %v42 = vld [vmem:[%s0 + $0x38] sm:$0xff]
  %v43 = vld [vmem:[%s1] sm:$0xff]
  %v44 = vld [vmem:[%s2] sm:$0x1]
  %v46 = vlaneseq
  %v47 = vshrl.u32 %v46, 7
  %v48 = vsub.s32 0, %v47
  %v49 = vrot.slane %v44, %v48
  %vm51 = vcmask 64512
  %v53 = vsel %vm51, %v35, 0
  %v56 = vsel %vm51, %v36, 0
  %v59 = vsel %vm51, %v37, 0
  %v62 = vsel %vm51, %v38, 0
  %v65 = vsel %vm51, %v39, 0
  %v68 = vsel %vm51, %v40, 0
  %v71 = vsel %vm51, %v41, 0
  %v74 = vsel %vm51, %v42, 0
  %76 = vmatprep.subr.mxu0 0.0
  %77 = vmatpush1.msra.mxu0 %v43
  %78 = vmatprep.subr.mxu0 0.0
  %79 = vmatpush1.msra.mxu0 0.0
  %80 = vmatprep.subr.mxu0 0.0
  %81 = vmatpush1.msra.mxu0 0.0
  %82 = vmatprep.subr.mxu0 0.0
  %83 = vmatpush1.msra.mxu0 0.0
  %84 = vmatprep.subr.mxu0 0.0
  %85 = vmatpush1.msra.mxu0 0.0
  %86 = vmatprep.subr.mxu0 0.0
  %87 = vmatpush1.msra.mxu0 0.0
  %88 = vmatprep.subr.mxu0 0.0
  %89 = vmatpush1.msra.mxu0 0.0
  %90 = vmatprep.subr.mxu0 0.0
  %91 = vmatpush1.msra.mxu0 0.0
  %92 = vmatprep.subr.mxu0 0.0
  %93 = vmatpush1.msra.mxu0 0.0
  %94 = vmatprep.subr.mxu0 0.0
  %95 = vmatpush1.msra.mxu0 0.0
  %96 = vmatprep.subr.mxu0 0.0
  %97 = vmatpush1.msra.mxu0 0.0
  %98 = vmatprep.subr.mxu0 0.0
  %99 = vmatpush1.msra.mxu0 0.0
  %100 = vmatprep.subr.mxu0 0.0
  %101 = vmatpush1.msra.mxu0 0.0
  %102 = vmatprep.subr.mxu0 0.0
  %103 = vmatpush1.msra.mxu0 0.0
  %104 = vmatprep.subr.mxu0 0.0
  %105 = vmatpush1.msra.mxu0 0.0
  %106 = vmatprep.subr.mxu0 0.0
  %107 = vmatpush1.msra.mxu0 0.0
  %108 = vmatprep.subr.mxu0 0.0
  %109 = vmatpush1.msra.mxu0 0.0
  %110 = vmatprep.subr.mxu0 0.0
  %111 = vmatpush1.msra.mxu0 0.0
  %112 = vmatprep.subr.mxu0 0.0
  %113 = vmatpush1.msra.mxu0 0.0
  %114 = vmatprep.subr.mxu0 0.0
  %115 = vmatpush1.msra.mxu0 0.0
  %116 = vmatprep.subr.mxu0 0.0
  %117 = vmatpush1.msra.mxu0 0.0
  %118 = vmatprep.subr.mxu0 0.0
  %119 = vmatpush1.msra.mxu0 0.0
  %120 = vmatprep.subr.mxu0 0.0
  %121 = vmatpush1.msra.mxu0 0.0
  %122 = vmatprep.subr.mxu0 0.0
  %123 = vmatpush1.msra.mxu0 0.0
  %124 = vmatprep.subr.mxu0 0.0
  %125 = vmatpush1.msra.mxu0 0.0
  %126 = vmatprep.subr.mxu0 0.0
  %127 = vmatpush1.msra.mxu0 0.0
  %128 = vmatprep.subr.mxu0 0.0
  %129 = vmatpush1.msra.mxu0 0.0
  %130 = vmatprep.subr.mxu0 0.0
  %131 = vmatpush1.msra.mxu0 0.0
  %132 = vmatprep.subr.mxu0 0.0
  %133 = vmatpush1.msra.mxu0 0.0
  %134 = vmatprep.subr.mxu0 0.0
  %135 = vmatpush1.msra.mxu0 0.0
  %136 = vmatprep.subr.mxu0 0.0
  %137 = vmatpush1.msra.mxu0 0.0
  %138 = vmatprep.subr.mxu0 0.0
  %139 = vmatpush1.msra.mxu0 0.0
  %140 = vmatprep.mubr.f32.mxu0 0.0
  %141 = vmatmul.mubr.f32.gmra.mrb[0].mxu0 %v53
  %v142 = vpop.f32.mrb[0].mxu0
  %v143 = vadd.f32 %v49, %v142
  %v144 = vpop.f32.mrb[0].mxu0
  %145 = vmatprep.mubr.f32.mxu0 0.0
  %146 = vmatmul.mubr.f32.gmra.mrb[0].mxu0 %v56
  %v147 = vpop.f32.mrb[0].mxu0
  %v148 = vadd.f32 %v49, %v147
  %v149 = vpop.f32.mrb[0].mxu0
  %150 = vmatprep.mubr.f32.mxu0 0.0
  %151 = vmatmul.mubr.f32.gmra.mrb[0].mxu0 %v59
  %v152 = vpop.f32.mrb[0].mxu0
  %v153 = vadd.f32 %v49, %v152
  %v154 = vpop.f32.mrb[0].mxu0
  %155 = vmatprep.mubr.f32.mxu0 0.0
  %156 = vmatmul.mubr.f32.gmra.mrb[0].mxu0 %v62
  %v157 = vpop.f32.mrb[0].mxu0
  %v158 = vadd.f32 %v49, %v157
  %v159 = vpop.f32.mrb[0].mxu0
  %160 = vmatprep.mubr.f32.mxu0 0.0
  %161 = vmatmul.mubr.f32.gmra.mrb[0].mxu0 %v65
  %v162 = vpop.f32.mrb[0].mxu0
  %v163 = vadd.f32 %v49, %v162
  %v164 = vpop.f32.mrb[0].mxu0
  %165 = vmatprep.mubr.f32.mxu0 0.0
  %166 = vmatmul.mubr.f32.gmra.mrb[0].mxu0 %v68
  %v167 = vpop.f32.mrb[0].mxu0
  %v168 = vadd.f32 %v49, %v167
  %v169 = vpop.f32.mrb[0].mxu0
  %170 = vmatprep.mubr.f32.mxu0 0.0
  %171 = vmatmul.mubr.f32.gmra.mrb[0].mxu0 %v71
  %v172 = vpop.f32.mrb[0].mxu0
  %v173 = vadd.f32 %v49, %v172
  %v174 = vpop.f32.mrb[0].mxu0
  %175 = vmatprep.mubr.f32.mxu0 0.0
  %176 = vmatmul.mubr.f32.gmra.mrb[0].mxu0 %v74
  %v177 = vpop.f32.mrb[0].mxu0
  %v178 = vadd.f32 %v49, %v177
  %v179 = vpop.f32.mrb[0].mxu0
  %180 = vdwg.mxu0
  %v181 = vld [vmem:[%s3] sm:$0xff]
  %v182 = vld [vmem:[%s3 + $0x8] sm:$0xff]
  %v183 = vld [vmem:[%s3 + $0x10] sm:$0xff]
  %v184 = vld [vmem:[%s3 + $0x18] sm:$0xff]
  %v185 = vld [vmem:[%s3 + $0x20] sm:$0xff]
  %v186 = vld [vmem:[%s3 + $0x28] sm:$0xff]
  %v187 = vld [vmem:[%s3 + $0x30] sm:$0xff]
  %v188 = vld [vmem:[%s3 + $0x38] sm:$0xff]
  %v189 = vld [vmem:[%s3 + $0x40] sm:$0xff]
  %v190 = vld [vmem:[%s3 + $0x48] sm:$0xff]
  %v191 = vld [vmem:[%s3 + $0x50] sm:$0xff]
  %v192 = vld [vmem:[%s3 + $0x58] sm:$0xff]
  %v193 = vld [vmem:[%s3 + $0x60] sm:$0xff]
  %v194 = vld [vmem:[%s3 + $0x68] sm:$0xff]
  %v195 = vld [vmem:[%s3 + $0x70] sm:$0xff]
  %v196 = vld [vmem:[%s3 + $0x78] sm:$0xff]
  %v197 = vld [vmem:[%s4] sm:$0x1]
  %v199 = vlaneseq
  %v200 = vshrl.u32 %v199, 7
  %v201 = vsub.s32 0, %v200
  %v202 = vrot.slane %v197, %v201
  %v204 = vld [vmem:[%s7] sm:$0xff]
  %v205 = vld [vmem:[%s8] sm:$0xff]
  %s206 = scalar_lea.vmem %s7, 8
  %v207 = vld [vmem:[%s206] sm:$0xff]
  %s208 = scalar_lea.vmem %s8, 8
  %v209 = vld [vmem:[%s208] sm:$0xff]
  %vm210 = vcmask 261120
  %211 = vst.msk [vmem:[#allocation2] sm:$0xff] %vm210, %v204
  %213 = vrot.lane.b32.xlu0 %v207, 32
  %v214 = vpop.permute.xlu0 %213
  %vm216 = vcmask 523520
  %217 = vst.msk [vmem:[#allocation2] sm:$0xff] %vm216, %v214
  %v218 = vld [vmem:[#allocation2] sm:$0xff]
  %vm219 = vcmask 523264
  %v221 = vsel %vm219, %v218, 0
  %223 = vmatprep.subr.mxu0 %v182
  %224 = vmatpush1.msra.mxu0 %v181
  %225 = vmatprep.subr.mxu0 %v184
  %226 = vmatpush1.msra.mxu0 %v183
  %227 = vmatprep.subr.mxu0 %v186
  %228 = vmatpush1.msra.mxu0 %v185
  %229 = vmatprep.subr.mxu0 %v188
  %230 = vmatpush1.msra.mxu0 %v187
  %231 = vmatprep.subr.mxu0 %v190
  %232 = vmatpush1.msra.mxu0 %v189
  %233 = vmatprep.subr.mxu0 %v192
  %234 = vmatpush1.msra.mxu0 %v191
  %235 = vmatprep.subr.mxu0 %v194
  %236 = vmatpush1.msra.mxu0 %v193
  %237 = vmatprep.subr.mxu0 %v196
  %238 = vmatpush1.msra.mxu0 %v195
  %239 = vmatprep.subr.mxu0 0.0
  %240 = vmatpush1.msra.mxu0 0.0
  %241 = vmatprep.subr.mxu0 0.0
  %242 = vmatpush1.msra.mxu0 0.0
  %243 = vmatprep.subr.mxu0 0.0
  %244 = vmatpush1.msra.mxu0 0.0
  %245 = vmatprep.subr.mxu0 0.0
  %246 = vmatpush1.msra.mxu0 0.0
  %247 = vmatprep.subr.mxu0 0.0
  %248 = vmatpush1.msra.mxu0 0.0
  %249 = vmatprep.subr.mxu0 0.0
  %250 = vmatpush1.msra.mxu0 0.0
  %251 = vmatprep.subr.mxu0 0.0
  %252 = vmatpush1.msra.mxu0 0.0
  %253 = vmatprep.subr.mxu0 0.0
  %254 = vmatpush1.msra.mxu0 0.0
  %255 = vmatprep.subr.mxu0 0.0
  %256 = vmatpush1.msra.mxu0 0.0
  %257 = vmatprep.subr.mxu0 0.0
  %258 = vmatpush1.msra.mxu0 0.0
  %259 = vmatprep.subr.mxu0 0.0
  %260 = vmatpush1.msra.mxu0 0.0
  %261 = vmatprep.subr.mxu0 0.0
  %262 = vmatpush1.msra.mxu0 0.0
  %263 = vmatprep.subr.mxu0 0.0
  %264 = vmatpush1.msra.mxu0 0.0
  %265 = vmatprep.subr.mxu0 0.0
  %266 = vmatpush1.msra.mxu0 0.0
  %267 = vmatprep.subr.mxu0 0.0
  %268 = vmatpush1.msra.mxu0 0.0
  %269 = vmatprep.subr.mxu0 0.0
  %270 = vmatpush1.msra.mxu0 0.0
  %271 = vmatprep.subr.mxu0 0.0
  %272 = vmatpush1.msra.mxu0 0.0
  %273 = vmatprep.subr.mxu0 0.0
  %274 = vmatpush1.msra.mxu0 0.0
  %275 = vmatprep.subr.mxu0 0.0
  %276 = vmatpush1.msra.mxu0 0.0
  %277 = vmatprep.subr.mxu0 0.0
  %278 = vmatpush1.msra.mxu0 0.0
  %279 = vmatprep.subr.mxu0 0.0
  %280 = vmatpush1.msra.mxu0 0.0
  %281 = vmatprep.subr.mxu0 0.0
  %282 = vmatpush1.msra.mxu0 0.0
  %283 = vmatprep.subr.mxu0 0.0
  %284 = vmatpush1.msra.mxu0 0.0
  %285 = vmatprep.subr.mxu0 0.0
  %286 = vmatpush1.msra.mxu0 0.0
  %287 = vmatprep.mubr.f32.mxu0 0.0
  %288 = vmatmul.mubr.f32.gmra.mrb[0].mxu0 %v221
  %v289 = vpop.f32.mrb[0].mxu0
  %v290 = vadd.f32 0.0, %v289
  %v291 = vpop.f32.mrb[0].mxu0
  %292 = vdwg.mxu0
  %v293 = vadd.f32 %v143, %v290
  %v294 = vxor.u32 %v293, 2147483648
  %v295 = vmul.f32 %v294, 1.442695
  %v296 = vpow.pop %v295
  %v297 = vadd.f32 %v296, 1.0
  %v298 = vrcp.pop %v297
  %v299 = vmul.f32 1.0, %v298
  %v300 = vtanh.pop %v293
  %302 = vrot.lane.b32.xlu0 %v205, 32
  %v303 = vpop.permute.xlu0 %302
  %v305 = vmul.f32 %v299, %v303
  %307 = vrot.lane.b32.xlu0 %v300, 64
  %v308 = vpop.permute.xlu0 %307
  %v310 = vmul.f32 %v299, %v308
  %312 = vrot.lane.b32.xlu0 %v310, 32
  %v313 = vpop.permute.xlu0 %312
  %v315 = vadd.f32 %v305, %v313
  %v316 = vtanh.pop %v315
  %318 = vrot.lane.b32.xlu0 %v316, 64
  %v319 = vpop.permute.xlu0 %318
  %v321 = vmul.f32 %v299, %v319
  %323 = vrot.lane.b32.xlu0 %v321, 32
  %v324 = vpop.permute.xlu0 %323
  %326 = vst.msk [vmem:[#allocation2] sm:$0xff] %vm210, %v324
  %v327 = vld [vmem:[#allocation2] sm:$0xff]
  %v329 = vsel %vm219, %v327, 0
  %331 = vmatprep.subr.mxu0 %v182
  %332 = vmatpush1.msra.mxu0 %v181
  %333 = vmatprep.subr.mxu0 %v184
  %334 = vmatpush1.msra.mxu0 %v183
  %335 = vmatprep.subr.mxu0 %v186
  %336 = vmatpush1.msra.mxu0 %v185
  %337 = vmatprep.subr.mxu0 %v188
  %338 = vmatpush1.msra.mxu0 %v187
  %339 = vmatprep.subr.mxu0 %v190
  %340 = vmatpush1.msra.mxu0 %v189
  %341 = vmatprep.subr.mxu0 %v192
  %342 = vmatpush1.msra.mxu0 %v191
  %343 = vmatprep.subr.mxu0 %v194
  %344 = vmatpush1.msra.mxu0 %v193
  %345 = vmatprep.subr.mxu0 %v196
  %346 = vmatpush1.msra.mxu0 %v195
  %347 = vmatprep.subr.mxu0 0.0
  %348 = vmatpush1.msra.mxu0 0.0
  %349 = vmatprep.subr.mxu0 0.0
  %350 = vmatpush1.msra.mxu0 0.0
  %351 = vmatprep.subr.mxu0 0.0
  %352 = vmatpush1.msra.mxu0 0.0
  %353 = vmatprep.subr.mxu0 0.0
  %354 = vmatpush1.msra.mxu0 0.0
  %355 = vmatprep.subr.mxu0 0.0
  %356 = vmatpush1.msra.mxu0 0.0
  %357 = vmatprep.subr.mxu0 0.0
  %358 = vmatpush1.msra.mxu0 0.0
  %359 = vmatprep.subr.mxu0 0.0
  %360 = vmatpush1.msra.mxu0 0.0
  %361 = vmatprep.subr.mxu0 0.0
  %362 = vmatpush1.msra.mxu0 0.0
  %363 = vmatprep.subr.mxu0 0.0
  %364 = vmatpush1.msra.mxu0 0.0
  %365 = vmatprep.subr.mxu0 0.0
  %366 = vmatpush1.msra.mxu0 0.0
  %367 = vmatprep.subr.mxu0 0.0
  %368 = vmatpush1.msra.mxu0 0.0
  %369 = vmatprep.subr.mxu0 0.0
  %370 = vmatpush1.msra.mxu0 0.0
  %371 = vmatprep.subr.mxu0 0.0
  %372 = vmatpush1.msra.mxu0 0.0
  %373 = vmatprep.subr.mxu0 0.0
  %374 = vmatpush1.msra.mxu0 0.0
  %375 = vmatprep.subr.mxu0 0.0
  %376 = vmatpush1.msra.mxu0 0.0
  %377 = vmatprep.subr.mxu0 0.0
  %378 = vmatpush1.msra.mxu0 0.0
  %379 = vmatprep.subr.mxu0 0.0
  %380 = vmatpush1.msra.mxu0 0.0
  %381 = vmatprep.subr.mxu0 0.0
  %382 = vmatpush1.msra.mxu0 0.0
  %383 = vmatprep.subr.mxu0 0.0
  %384 = vmatpush1.msra.mxu0 0.0
  %385 = vmatprep.subr.mxu0 0.0
  %386 = vmatpush1.msra.mxu0 0.0
  %387 = vmatprep.subr.mxu0 0.0
  %388 = vmatpush1.msra.mxu0 0.0
  %389 = vmatprep.subr.mxu0 0.0
  %390 = vmatpush1.msra.mxu0 0.0
  %391 = vmatprep.subr.mxu0 0.0
  %392 = vmatpush1.msra.mxu0 0.0
  %393 = vmatprep.subr.mxu0 0.0
  %394 = vmatpush1.msra.mxu0 0.0
  %395 = vmatprep.mubr.f32.mxu0 0.0
  %396 = vmatmul.mubr.f32.gmra.mrb[0].mxu0 %v329
  %v397 = vpop.f32.mrb[0].mxu0
  %v398 = vadd.f32 0.0, %v397
  %v399 = vpop.f32.mrb[0].mxu0
  %v400 = vadd.f32 0.0, %v399
  %401 = vdwg.mxu0
  %v402 = vadd.f32 %v400, %v202
  %v403 = vxor.u32 %v402, 2147483648
  %v404 = vmul.f32 %v403, 1.442695
  %v405 = vpow.pop %v404
  %v406 = vadd.f32 %v405, 1.0
  %v407 = vrcp.pop %v406
  %v408 = vmul.f32 1.0, %v407
  %v409 = vtanh.pop %v402
  %411 = vrot.lane.b32.xlu0 %v209, 32
  %v412 = vpop.permute.xlu0 %411
  %v414 = vmul.f32 %v408, %v412
  %416 = vrot.lane.b32.xlu0 %v409, 64
  %v417 = vpop.permute.xlu0 %416
  %v419 = vmul.f32 %v408, %v417
  %421 = vrot.lane.b32.xlu0 %v419, 32
  %v422 = vpop.permute.xlu0 %421
  %v424 = vadd.f32 %v414, %v422
  %v425 = vtanh.pop %v424
  %427 = vrot.lane.b32.xlu0 %v425, 64
  %v428 = vpop.permute.xlu0 %427
  %v430 = vmul.f32 %v408, %v428
  %432 = vrot.lane.b32.xlu0 %v430, 64
  %v433 = vpop.permute.xlu0 %432
  %435 = vst.msk [vmem:[#allocation2] sm:$0xff] %vm216, %v433
  %v436 = vadd.f32 %v148, %v398
  %v437 = vxor.u32 %v436, 2147483648
  %v438 = vmul.f32 %v437, 1.442695
  %v439 = vpow.pop %v438
  %v440 = vadd.f32 %v439, 1.0
  %v441 = vrcp.pop %v440
  %v442 = vmul.f32 1.0, %v441
  %v443 = vtanh.pop %v436
  %v444 = vmul.f32 %v442, %v315
  %446 = vrot.lane.b32.xlu0 %v443, 64
  %v447 = vpop.permute.xlu0 %446
  %v449 = vmul.f32 %v442, %v447
  %451 = vrot.lane.b32.xlu0 %v449, 32
  %v452 = vpop.permute.xlu0 %451
  %v454 = vadd.f32 %v444, %v452
  %v455 = vtanh.pop %v454
  %457 = vrot.lane.b32.xlu0 %v455, 64
  %v458 = vpop.permute.xlu0 %457
  %v460 = vmul.f32 %v442, %v458
  %462 = vrot.lane.b32.xlu0 %v460, 32
  %v463 = vpop.permute.xlu0 %462
  %465 = vst.msk [vmem:[#allocation2] sm:$0xff] %vm210, %v463
  %v466 = vld [vmem:[#allocation2] sm:$0xff]
  %v468 = vsel %vm219, %v466, 0
  %470 = vmatprep.subr.mxu0 %v182
  %471 = vmatpush1.msra.mxu0 %v181
  %472 = vmatprep.subr.mxu0 %v184
  %473 = vmatpush1.msra.mxu0 %v183
  %474 = vmatprep.subr.mxu0 %v186
  %475 = vmatpush1.msra.mxu0 %v185
  %476 = vmatprep.subr.mxu0 %v188
  %477 = vmatpush1.msra.mxu0 %v187
  %478 = vmatprep.subr.mxu0 %v190
  %479 = vmatpush1.msra.mxu0 %v189
  %480 = vmatprep.subr.mxu0 %v192
  %481 = vmatpush1.msra.mxu0 %v191
  %482 = vmatprep.subr.mxu0 %v194
  %483 = vmatpush1.msra.mxu0 %v193
  %484 = vmatprep.subr.mxu0 %v196
  %485 = vmatpush1.msra.mxu0 %v195
  %486 = vmatprep.subr.mxu0 0.0
  %487 = vmatpush1.msra.mxu0 0.0
  %488 = vmatprep.subr.mxu0 0.0
  %489 = vmatpush1.msra.mxu0 0.0
  %490 = vmatprep.subr.mxu0 0.0
  %491 = vmatpush1.msra.mxu0 0.0
  %492 = vmatprep.subr.mxu0 0.0
  %493 = vmatpush1.msra.mxu0 0.0
  %494 = vmatprep.subr.mxu0 0.0
  %495 = vmatpush1.msra.mxu0 0.0
  %496 = vmatprep.subr.mxu0 0.0
  %497 = vmatpush1.msra.mxu0 0.0
  %498 = vmatprep.subr.mxu0 0.0
  %499 = vmatpush1.msra.mxu0 0.0
  %500 = vmatprep.subr.mxu0 0.0
  %501 = vmatpush1.msra.mxu0 0.0
  %502 = vmatprep.subr.mxu0 0.0
  %503 = vmatpush1.msra.mxu0 0.0
  %504 = vmatprep.subr.mxu0 0.0
  %505 = vmatpush1.msra.mxu0 0.0
  %506 = vmatprep.subr.mxu0 0.0
  %507 = vmatpush1.msra.mxu0 0.0
  %508 = vmatprep.subr.mxu0 0.0
  %509 = vmatpush1.msra.mxu0 0.0
  %510 = vmatprep.subr.mxu0 0.0
  %511 = vmatpush1.msra.mxu0 0.0
  %512 = vmatprep.subr.mxu0 0.0
  %513 = vmatpush1.msra.mxu0 0.0
  %514 = vmatprep.subr.mxu0 0.0
  %515 = vmatpush1.msra.mxu0 0.0
  %516 = vmatprep.subr.mxu0 0.0
  %517 = vmatpush1.msra.mxu0 0.0
  %518 = vmatprep.subr.mxu0 0.0
  %519 = vmatpush1.msra.mxu0 0.0
  %520 = vmatprep.subr.mxu0 0.0
  %521 = vmatpush1.msra.mxu0 0.0
  %522 = vmatprep.subr.mxu0 0.0
  %523 = vmatpush1.msra.mxu0 0.0
  %524 = vmatprep.subr.mxu0 0.0
  %525 = vmatpush1.msra.mxu0 0.0
  %526 = vmatprep.subr.mxu0 0.0
  %527 = vmatpush1.msra.mxu0 0.0
  %528 = vmatprep.subr.mxu0 0.0
  %529 = vmatpush1.msra.mxu0 0.0
  %530 = vmatprep.subr.mxu0 0.0
  %531 = vmatpush1.msra.mxu0 0.0
  %532 = vmatprep.subr.mxu0 0.0
  %533 = vmatpush1.msra.mxu0 0.0
  %534 = vmatprep.mubr.f32.mxu0 0.0
  %535 = vmatmul.mubr.f32.gmra.mrb[0].mxu0 %v468
  %v536 = vpop.f32.mrb[0].mxu0
  %v537 = vadd.f32 0.0, %v536
  %v538 = vpop.f32.mrb[0].mxu0
  %v539 = vadd.f32 0.0, %v538
  %540 = vdwg.mxu0
  %v541 = vadd.f32 %v539, %v202
  %v542 = vxor.u32 %v541, 2147483648
  %v543 = vmul.f32 %v542, 1.442695
  %v544 = vpow.pop %v543
  %v545 = vadd.f32 %v544, 1.0
  %v546 = vrcp.pop %v545
  %v547 = vmul.f32 1.0, %v546
  %v548 = vtanh.pop %v541
  %v549 = vmul.f32 %v547, %v424
  %551 = vrot.lane.b32.xlu0 %v548, 64
  %v552 = vpop.permute.xlu0 %551
  %v554 = vmul.f32 %v547, %v552
  %556 = vrot.lane.b32.xlu0 %v554, 32
  %v557 = vpop.permute.xlu0 %556
  %v559 = vadd.f32 %v549, %v557
  %v560 = vtanh.pop %v559
  %562 = vrot.lane.b32.xlu0 %v560, 64
  %v563 = vpop.permute.xlu0 %562
  %v565 = vmul.f32 %v547, %v563
  %567 = vrot.lane.b32.xlu0 %v565, 64
  %v568 = vpop.permute.xlu0 %567
  %570 = vst.msk [vmem:[#allocation2] sm:$0xff] %vm216, %v568
  %v571 = vadd.f32 %v153, %v537
  %v572 = vxor.u32 %v571, 2147483648
  %v573 = vmul.f32 %v572, 1.442695
  %v574 = vpow.pop %v573
  %v575 = vadd.f32 %v574, 1.0
  %v576 = vrcp.pop %v575
  %v577 = vmul.f32 1.0, %v576
  %v578 = vtanh.pop %v571
  %v579 = vmul.f32 %v577, %v454
  %581 = vrot.lane.b32.xlu0 %v578, 64
  %v582 = vpop.permute.xlu0 %581
  %v584 = vmul.f32 %v577, %v582
  %586 = vrot.lane.b32.xlu0 %v584, 32
  %v587 = vpop.permute.xlu0 %586
  %v589 = vadd.f32 %v579, %v587
  %v590 = vtanh.pop %v589
  %592 = vrot.lane.b32.xlu0 %v590, 64
  %v593 = vpop.permute.xlu0 %592
  %v595 = vmul.f32 %v577, %v593
  %597 = vrot.lane.b32.xlu0 %v595, 32
  %v598 = vpop.permute.xlu0 %597
  %600 = vst.msk [vmem:[#allocation2] sm:$0xff] %vm210, %v598
  %v601 = vld [vmem:[#allocation2] sm:$0xff]
  %v603 = vsel %vm219, %v601, 0
  %605 = vmatprep.subr.mxu0 %v182
  %606 = vmatpush1.msra.mxu0 %v181
  %607 = vmatprep.subr.mxu0 %v184
  %608 = vmatpush1.msra.mxu0 %v183
  %609 = vmatprep.subr.mxu0 %v186
  %610 = vmatpush1.msra.mxu0 %v185
  %611 = vmatprep.subr.mxu0 %v188
  %612 = vmatpush1.msra.mxu0 %v187
  %613 = vmatprep.subr.mxu0 %v190
  %614 = vmatpush1.msra.mxu0 %v189
  %615 = vmatprep.subr.mxu0 %v192
  %616 = vmatpush1.msra.mxu0 %v191
  %617 = vmatprep.subr.mxu0 %v194
  %618 = vmatpush1.msra.mxu0 %v193
  %619 = vmatprep.subr.mxu0 %v196
  %620 = vmatpush1.msra.mxu0 %v195
  %621 = vmatprep.subr.mxu0 0.0
  %622 = vmatpush1.msra.mxu0 0.0
  %623 = vmatprep.subr.mxu0 0.0
  %624 = vmatpush1.msra.mxu0 0.0
  %625 = vmatprep.subr.mxu0 0.0
  %626 = vmatpush1.msra.mxu0 0.0
  %627 = vmatprep.subr.mxu0 0.0
  %628 = vmatpush1.msra.mxu0 0.0
  %629 = vmatprep.subr.mxu0 0.0
  %630 = vmatpush1.msra.mxu0 0.0
  %631 = vmatprep.subr.mxu0 0.0
  %632 = vmatpush1.msra.mxu0 0.0
  %633 = vmatprep.subr.mxu0 0.0
  %634 = vmatpush1.msra.mxu0 0.0
  %635 = vmatprep.subr.mxu0 0.0
  %636 = vmatpush1.msra.mxu0 0.0
  %637 = vmatprep.subr.mxu0 0.0
  %638 = vmatpush1.msra.mxu0 0.0
  %639 = vmatprep.subr.mxu0 0.0
  %640 = vmatpush1.msra.mxu0 0.0
  %641 = vmatprep.subr.mxu0 0.0
  %642 = vmatpush1.msra.mxu0 0.0
  %643 = vmatprep.subr.mxu0 0.0
  %644 = vmatpush1.msra.mxu0 0.0
  %645 = vmatprep.subr.mxu0 0.0
  %646 = vmatpush1.msra.mxu0 0.0
  %647 = vmatprep.subr.mxu0 0.0
  %648 = vmatpush1.msra.mxu0 0.0
  %649 = vmatprep.subr.mxu0 0.0
  %650 = vmatpush1.msra.mxu0 0.0
  %651 = vmatprep.subr.mxu0 0.0
  %652 = vmatpush1.msra.mxu0 0.0
  %653 = vmatprep.subr.mxu0 0.0
  %654 = vmatpush1.msra.mxu0 0.0
  %655 = vmatprep.subr.mxu0 0.0
  %656 = vmatpush1.msra.mxu0 0.0
  %657 = vmatprep.subr.mxu0 0.0
  %658 = vmatpush1.msra.mxu0 0.0
  %659 = vmatprep.subr.mxu0 0.0
  %660 = vmatpush1.msra.mxu0 0.0
  %661 = vmatprep.subr.mxu0 0.0
  %662 = vmatpush1.msra.mxu0 0.0
  %663 = vmatprep.subr.mxu0 0.0
  %664 = vmatpush1.msra.mxu0 0.0
  %665 = vmatprep.subr.mxu0 0.0
  %666 = vmatpush1.msra.mxu0 0.0
  %667 = vmatprep.subr.mxu0 0.0
  %668 = vmatpush1.msra.mxu0 0.0
  %669 = vmatprep.mubr.f32.mxu0 0.0
  %670 = vmatmul.mubr.f32.gmra.mrb[0].mxu0 %v603
  %v671 = vpop.f32.mrb[0].mxu0
  %v672 = vadd.f32 0.0, %v671
  %v673 = vpop.f32.mrb[0].mxu0
  %v674 = vadd.f32 0.0, %v673
  %675 = vdwg.mxu0
  %v676 = vadd.f32 %v674, %v202
  %v677 = vxor.u32 %v676, 2147483648
  %v678 = vmul.f32 %v677, 1.442695
  %v679 = vpow.pop %v678
  %v680 = vadd.f32 %v679, 1.0
  %v681 = vrcp.pop %v680
  %v682 = vmul.f32 1.0, %v681
  %v683 = vtanh.pop %v676
  %v684 = vmul.f32 %v682, %v559
  %686 = vrot.lane.b32.xlu0 %v683, 64
  %v687 = vpop.permute.xlu0 %686
  %v689 = vmul.f32 %v682, %v687
  %691 = vrot.lane.b32.xlu0 %v689, 32
  %v692 = vpop.permute.xlu0 %691
  %v694 = vadd.f32 %v684, %v692
  %v695 = vtanh.pop %v694
  %697 = vrot.lane.b32.xlu0 %v695, 64
  %v698 = vpop.permute.xlu0 %697
  %v700 = vmul.f32 %v682, %v698
  %702 = vrot.lane.b32.xlu0 %v700, 64
  %v703 = vpop.permute.xlu0 %702
  %705 = vst.msk [vmem:[#allocation2] sm:$0xff] %vm216, %v703
  %v706 = vadd.f32 %v158, %v672
  %v707 = vxor.u32 %v706, 2147483648
  %v708 = vmul.f32 %v707, 1.442695
  %v709 = vpow.pop %v708
  %v710 = vadd.f32 %v709, 1.0
  %v711 = vrcp.pop %v710
  %v712 = vmul.f32 1.0, %v711
  %v713 = vtanh.pop %v706
  %v714 = vmul.f32 %v712, %v589
  %716 = vrot.lane.b32.xlu0 %v713, 64
  %v717 = vpop.permute.xlu0 %716
  %v719 = vmul.f32 %v712, %v717
  %721 = vrot.lane.b32.xlu0 %v719, 32
  %v722 = vpop.permute.xlu0 %721
  %v724 = vadd.f32 %v714, %v722
  %v725 = vtanh.pop %v724
  %727 = vrot.lane.b32.xlu0 %v725, 64
  %v728 = vpop.permute.xlu0 %727
  %v730 = vmul.f32 %v712, %v728
  %732 = vrot.lane.b32.xlu0 %v730, 32
  %v733 = vpop.permute.xlu0 %732
  %735 = vst.msk [vmem:[#allocation2] sm:$0xff] %vm210, %v733
  %v736 = vld [vmem:[#allocation2] sm:$0xff]
  %v738 = vsel %vm219, %v736, 0
  %740 = vmatprep.subr.mxu0 %v182
  %741 = vmatpush1.msra.mxu0 %v181
  %742 = vmatprep.subr.mxu0 %v184
  %743 = vmatpush1.msra.mxu0 %v183
  %744 = vmatprep.subr.mxu0 %v186
  %745 = vmatpush1.msra.mxu0 %v185
  %746 = vmatprep.subr.mxu0 %v188
  %747 = vmatpush1.msra.mxu0 %v187
  %748 = vmatprep.subr.mxu0 %v190
  %749 = vmatpush1.msra.mxu0 %v189
  %750 = vmatprep.subr.mxu0 %v192
  %751 = vmatpush1.msra.mxu0 %v191
  %752 = vmatprep.subr.mxu0 %v194
  %753 = vmatpush1.msra.mxu0 %v193
  %754 = vmatprep.subr.mxu0 %v196
  %755 = vmatpush1.msra.mxu0 %v195
  %756 = vmatprep.subr.mxu0 0.0
  %757 = vmatpush1.msra.mxu0 0.0
  %758 = vmatprep.subr.mxu0 0.0
  %759 = vmatpush1.msra.mxu0 0.0
  %760 = vmatprep.subr.mxu0 0.0
  %761 = vmatpush1.msra.mxu0 0.0
  %762 = vmatprep.subr.mxu0 0.0
  %763 = vmatpush1.msra.mxu0 0.0
  %764 = vmatprep.subr.mxu0 0.0
  %765 = vmatpush1.msra.mxu0 0.0
  %766 = vmatprep.subr.mxu0 0.0
  %767 = vmatpush1.msra.mxu0 0.0
  %768 = vmatprep.subr.mxu0 0.0
  %769 = vmatpush1.msra.mxu0 0.0
  %770 = vmatprep.subr.mxu0 0.0
  %771 = vmatpush1.msra.mxu0 0.0
  %772 = vmatprep.subr.mxu0 0.0
  %773 = vmatpush1.msra.mxu0 0.0
  %774 = vmatprep.subr.mxu0 0.0
  %775 = vmatpush1.msra.mxu0 0.0
  %776 = vmatprep.subr.mxu0 0.0
  %777 = vmatpush1.msra.mxu0 0.0
  %778 = vmatprep.subr.mxu0 0.0
  %779 = vmatpush1.msra.mxu0 0.0
  %780 = vmatprep.subr.mxu0 0.0
  %781 = vmatpush1.msra.mxu0 0.0
  %782 = vmatprep.subr.mxu0 0.0
  %783 = vmatpush1.msra.mxu0 0.0
  %784 = vmatprep.subr.mxu0 0.0
  %785 = vmatpush1.msra.mxu0 0.0
  %786 = vmatprep.subr.mxu0 0.0
  %787 = vmatpush1.msra.mxu0 0.0
  %788 = vmatprep.subr.mxu0 0.0
  %789 = vmatpush1.msra.mxu0 0.0
  %790 = vmatprep.subr.mxu0 0.0
  %791 = vmatpush1.msra.mxu0 0.0
  %792 = vmatprep.subr.mxu0 0.0
  %793 = vmatpush1.msra.mxu0 0.0
  %794 = vmatprep.subr.mxu0 0.0
  %795 = vmatpush1.msra.mxu0 0.0
  %796 = vmatprep.subr.mxu0 0.0
  %797 = vmatpush1.msra.mxu0 0.0
  %798 = vmatprep.subr.mxu0 0.0
  %799 = vmatpush1.msra.mxu0 0.0
  %800 = vmatprep.subr.mxu0 0.0
  %801 = vmatpush1.msra.mxu0 0.0
  %802 = vmatprep.subr.mxu0 0.0
  %803 = vmatpush1.msra.mxu0 0.0
  %804 = vmatprep.mubr.f32.mxu0 0.0
  %805 = vmatmul.mubr.f32.gmra.mrb[0].mxu0 %v738
  %v806 = vpop.f32.mrb[0].mxu0
  %v807 = vadd.f32 0.0, %v806
  %v808 = vpop.f32.mrb[0].mxu0
  %v809 = vadd.f32 0.0, %v808
  %810 = vdwg.mxu0
  %v811 = vadd.f32 %v809, %v202
  %v812 = vxor.u32 %v811, 2147483648
  %v813 = vmul.f32 %v812, 1.442695
  %v814 = vpow.pop %v813
  %v815 = vadd.f32 %v814, 1.0
  %v816 = vrcp.pop %v815
  %v817 = vmul.f32 1.0, %v816
  %v818 = vtanh.pop %v811
  %v819 = vmul.f32 %v817, %v694
  %821 = vrot.lane.b32.xlu0 %v818, 64
  %v822 = vpop.permute.xlu0 %821
  %v824 = vmul.f32 %v817, %v822
  %826 = vrot.lane.b32.xlu0 %v824, 32
  %v827 = vpop.permute.xlu0 %826
  %v829 = vadd.f32 %v819, %v827
  %v830 = vtanh.pop %v829
  %832 = vrot.lane.b32.xlu0 %v830, 64
  %v833 = vpop.permute.xlu0 %832
  %v835 = vmul.f32 %v817, %v833
  %837 = vrot.lane.b32.xlu0 %v835, 64
  %v838 = vpop.permute.xlu0 %837
  %840 = vst.msk [vmem:[#allocation2] sm:$0xff] %vm216, %v838
  %v841 = vadd.f32 %v163, %v807
  %v842 = vxor.u32 %v841, 2147483648
  %v843 = vmul.f32 %v842, 1.442695
  %v844 = vpow.pop %v843
  %v845 = vadd.f32 %v844, 1.0
  %v846 = vrcp.pop %v845
  %v847 = vmul.f32 1.0, %v846
  %v848 = vtanh.pop %v841
  %v849 = vmul.f32 %v847, %v724
  %851 = vrot.lane.b32.xlu0 %v848, 64
  %v852 = vpop.permute.xlu0 %851
  %v854 = vmul.f32 %v847, %v852
  %856 = vrot.lane.b32.xlu0 %v854, 32
  %v857 = vpop.permute.xlu0 %856
  %v859 = vadd.f32 %v849, %v857
  %v860 = vtanh.pop %v859
  %862 = vrot.lane.b32.xlu0 %v860, 64
  %v863 = vpop.permute.xlu0 %862
  %v865 = vmul.f32 %v847, %v863
  %867 = vrot.lane.b32.xlu0 %v865, 32
  %v868 = vpop.permute.xlu0 %867
  %870 = vst.msk [vmem:[#allocation2] sm:$0xff] %vm210, %v868
  %v871 = vld [vmem:[#allocation2] sm:$0xff]
  %v873 = vsel %vm219, %v871, 0
  %875 = vmatprep.subr.mxu0 %v182
  %876 = vmatpush1.msra.mxu0 %v181
  %877 = vmatprep.subr.mxu0 %v184
  %878 = vmatpush1.msra.mxu0 %v183
  %879 = vmatprep.subr.mxu0 %v186
  %880 = vmatpush1.msra.mxu0 %v185
  %881 = vmatprep.subr.mxu0 %v188
  %882 = vmatpush1.msra.mxu0 %v187
  %883 = vmatprep.subr.mxu0 %v190
  %884 = vmatpush1.msra.mxu0 %v189
  %885 = vmatprep.subr.mxu0 %v192
  %886 = vmatpush1.msra.mxu0 %v191
  %887 = vmatprep.subr.mxu0 %v194
  %888 = vmatpush1.msra.mxu0 %v193
  %889 = vmatprep.subr.mxu0 %v196
  %890 = vmatpush1.msra.mxu0 %v195
  %891 = vmatprep.subr.mxu0 0.0
  %892 = vmatpush1.msra.mxu0 0.0
  %893 = vmatprep.subr.mxu0 0.0
  %894 = vmatpush1.msra.mxu0 0.0
  %895 = vmatprep.subr.mxu0 0.0
  %896 = vmatpush1.msra.mxu0 0.0
  %897 = vmatprep.subr.mxu0 0.0
  %898 = vmatpush1.msra.mxu0 0.0
  %899 = vmatprep.subr.mxu0 0.0
  %900 = vmatpush1.msra.mxu0 0.0
  %901 = vmatprep.subr.mxu0 0.0
  %902 = vmatpush1.msra.mxu0 0.0
  %903 = vmatprep.subr.mxu0 0.0
  %904 = vmatpush1.msra.mxu0 0.0
  %905 = vmatprep.subr.mxu0 0.0
  %906 = vmatpush1.msra.mxu0 0.0
  %907 = vmatprep.subr.mxu0 0.0
  %908 = vmatpush1.msra.mxu0 0.0
  %909 = vmatprep.subr.mxu0 0.0
  %910 = vmatpush1.msra.mxu0 0.0
  %911 = vmatprep.subr.mxu0 0.0
  %912 = vmatpush1.msra.mxu0 0.0
  %913 = vmatprep.subr.mxu0 0.0
  %914 = vmatpush1.msra.mxu0 0.0
  %915 = vmatprep.subr.mxu0 0.0
  %916 = vmatpush1.msra.mxu0 0.0
  %917 = vmatprep.subr.mxu0 0.0
  %918 = vmatpush1.msra.mxu0 0.0
  %919 = vmatprep.subr.mxu0 0.0
  %920 = vmatpush1.msra.mxu0 0.0
  %921 = vmatprep.subr.mxu0 0.0
  %922 = vmatpush1.msra.mxu0 0.0
  %923 = vmatprep.subr.mxu0 0.0
  %924 = vmatpush1.msra.mxu0 0.0
  %925 = vmatprep.subr.mxu0 0.0
  %926 = vmatpush1.msra.mxu0 0.0
  %927 = vmatprep.subr.mxu0 0.0
  %928 = vmatpush1.msra.mxu0 0.0
  %929 = vmatprep.subr.mxu0 0.0
  %930 = vmatpush1.msra.mxu0 0.0
  %931 = vmatprep.subr.mxu0 0.0
  %932 = vmatpush1.msra.mxu0 0.0
  %933 = vmatprep.subr.mxu0 0.0
  %934 = vmatpush1.msra.mxu0 0.0
  %935 = vmatprep.subr.mxu0 0.0
  %936 = vmatpush1.msra.mxu0 0.0
  %937 = vmatprep.subr.mxu0 0.0
  %938 = vmatpush1.msra.mxu0 0.0
  %939 = vmatprep.mubr.f32.mxu0 0.0
  %940 = vmatmul.mubr.f32.gmra.mrb[0].mxu0 %v873
  %v941 = vpop.f32.mrb[0].mxu0
  %v942 = vadd.f32 0.0, %v941
  %v943 = vpop.f32.mrb[0].mxu0
  %v944 = vadd.f32 0.0, %v943
  %945 = vdwg.mxu0
  %v946 = vadd.f32 %v944, %v202
  %v947 = vxor.u32 %v946, 2147483648
  %v948 = vmul.f32 %v947, 1.442695
  %v949 = vpow.pop %v948
  %v950 = vadd.f32 %v949, 1.0
  %v951 = vrcp.pop %v950
  %v952 = vmul.f32 1.0, %v951
  %v953 = vtanh.pop %v946
  %v954 = vmul.f32 %v952, %v829
  %956 = vrot.lane.b32.xlu0 %v953, 64
  %v957 = vpop.permute.xlu0 %956
  %v959 = vmul.f32 %v952, %v957
  %961 = vrot.lane.b32.xlu0 %v959, 32
  %v962 = vpop.permute.xlu0 %961
  %v964 = vadd.f32 %v954, %v962
  %v965 = vtanh.pop %v964
  %967 = vrot.lane.b32.xlu0 %v965, 64
  %v968 = vpop.permute.xlu0 %967
  %v970 = vmul.f32 %v952, %v968
  %972 = vrot.lane.b32.xlu0 %v970, 64
  %v973 = vpop.permute.xlu0 %972
  %975 = vst.msk [vmem:[#allocation2] sm:$0xff] %vm216, %v973
  %v976 = vadd.f32 %v168, %v942
  %v977 = vxor.u32 %v976, 2147483648
  %v978 = vmul.f32 %v977, 1.442695
  %v979 = vpow.pop %v978
  %v980 = vadd.f32 %v979, 1.0
  %v981 = vrcp.pop %v980
  %v982 = vmul.f32 1.0, %v981
  %v983 = vtanh.pop %v976
  %v984 = vmul.f32 %v982, %v859
  %986 = vrot.lane.b32.xlu0 %v983, 64
  %v987 = vpop.permute.xlu0 %986
  %v989 = vmul.f32 %v982, %v987
  %991 = vrot.lane.b32.xlu0 %v989, 32
  %v992 = vpop.permute.xlu0 %991
  %v994 = vadd.f32 %v984, %v992
  %v995 = vtanh.pop %v994
  %997 = vrot.lane.b32.xlu0 %v995, 64
  %v998 = vpop.permute.xlu0 %997
  %v1000 = vmul.f32 %v982, %v998
  %1002 = vrot.lane.b32.xlu0 %v1000, 32
  %v1003 = vpop.permute.xlu0 %1002
  %1005 = vst.msk [vmem:[#allocation2] sm:$0xff] %vm210, %v1003
  %v1006 = vld [vmem:[#allocation2] sm:$0xff]
  %v1008 = vsel %vm219, %v1006, 0
  %1010 = vmatprep.subr.mxu0 %v182
  %1011 = vmatpush1.msra.mxu0 %v181
  %1012 = vmatprep.subr.mxu0 %v184
  %1013 = vmatpush1.msra.mxu0 %v183
  %1014 = vmatprep.subr.mxu0 %v186
  %1015 = vmatpush1.msra.mxu0 %v185
  %1016 = vmatprep.subr.mxu0 %v188
  %1017 = vmatpush1.msra.mxu0 %v187
  %1018 = vmatprep.subr.mxu0 %v190
  %1019 = vmatpush1.msra.mxu0 %v189
  %1020 = vmatprep.subr.mxu0 %v192
  %1021 = vmatpush1.msra.mxu0 %v191
  %1022 = vmatprep.subr.mxu0 %v194
  %1023 = vmatpush1.msra.mxu0 %v193
  %1024 = vmatprep.subr.mxu0 %v196
  %1025 = vmatpush1.msra.mxu0 %v195
  %1026 = vmatprep.subr.mxu0 0.0
  %1027 = vmatpush1.msra.mxu0 0.0
  %1028 = vmatprep.subr.mxu0 0.0
  %1029 = vmatpush1.msra.mxu0 0.0
  %1030 = vmatprep.subr.mxu0 0.0
  %1031 = vmatpush1.msra.mxu0 0.0
  %1032 = vmatprep.subr.mxu0 0.0
  %1033 = vmatpush1.msra.mxu0 0.0
  %1034 = vmatprep.subr.mxu0 0.0
  %1035 = vmatpush1.msra.mxu0 0.0
  %1036 = vmatprep.subr.mxu0 0.0
  %1037 = vmatpush1.msra.mxu0 0.0
  %1038 = vmatprep.subr.mxu0 0.0
  %1039 = vmatpush1.msra.mxu0 0.0
  %1040 = vmatprep.subr.mxu0 0.0
  %1041 = vmatpush1.msra.mxu0 0.0
  %1042 = vmatprep.subr.mxu0 0.0
  %1043 = vmatpush1.msra.mxu0 0.0
  %1044 = vmatprep.subr.mxu0 0.0
  %1045 = vmatpush1.msra.mxu0 0.0
  %1046 = vmatprep.subr.mxu0 0.0
  %1047 = vmatpush1.msra.mxu0 0.0
  %1048 = vmatprep.subr.mxu0 0.0
  %1049 = vmatpush1.msra.mxu0 0.0
  %1050 = vmatprep.subr.mxu0 0.0
  %1051 = vmatpush1.msra.mxu0 0.0
  %1052 = vmatprep.subr.mxu0 0.0
  %1053 = vmatpush1.msra.mxu0 0.0
  %1054 = vmatprep.subr.mxu0 0.0
  %1055 = vmatpush1.msra.mxu0 0.0
  %1056 = vmatprep.subr.mxu0 0.0
  %1057 = vmatpush1.msra.mxu0 0.0
  %1058 = vmatprep.subr.mxu0 0.0
  %1059 = vmatpush1.msra.mxu0 0.0
  %1060 = vmatprep.subr.mxu0 0.0
  %1061 = vmatpush1.msra.mxu0 0.0
  %1062 = vmatprep.subr.mxu0 0.0
  %1063 = vmatpush1.msra.mxu0 0.0
  %1064 = vmatprep.subr.mxu0 0.0
  %1065 = vmatpush1.msra.mxu0 0.0
  %1066 = vmatprep.subr.mxu0 0.0
  %1067 = vmatpush1.msra.mxu0 0.0
  %1068 = vmatprep.subr.mxu0 0.0
  %1069 = vmatpush1.msra.mxu0 0.0
  %1070 = vmatprep.subr.mxu0 0.0
  %1071 = vmatpush1.msra.mxu0 0.0
  %1072 = vmatprep.subr.mxu0 0.0
  %1073 = vmatpush1.msra.mxu0 0.0
  %1074 = vmatprep.mubr.f32.mxu0 0.0
  %1075 = vmatmul.mubr.f32.gmra.mrb[0].mxu0 %v1008
  %v1076 = vpop.f32.mrb[0].mxu0
  %v1077 = vadd.f32 0.0, %v1076
  %v1078 = vpop.f32.mrb[0].mxu0
  %v1079 = vadd.f32 0.0, %v1078
  %1080 = vdwg.mxu0
  %v1081 = vadd.f32 %v1079, %v202
  %v1082 = vxor.u32 %v1081, 2147483648
  %v1083 = vmul.f32 %v1082, 1.442695
  %v1084 = vpow.pop %v1083
  %v1085 = vadd.f32 %v1084, 1.0
  %v1086 = vrcp.pop %v1085
  %v1087 = vmul.f32 1.0, %v1086
  %v1088 = vtanh.pop %v1081
  %v1089 = vmul.f32 %v1087, %v964
  %1091 = vrot.lane.b32.xlu0 %v1088, 64
  %v1092 = vpop.permute.xlu0 %1091
  %v1094 = vmul.f32 %v1087, %v1092
  %1096 = vrot.lane.b32.xlu0 %v1094, 32
  %v1097 = vpop.permute.xlu0 %1096
  %v1099 = vadd.f32 %v1089, %v1097
  %v1100 = vtanh.pop %v1099
  %1102 = vrot.lane.b32.xlu0 %v1100, 64
  %v1103 = vpop.permute.xlu0 %1102
  %v1105 = vmul.f32 %v1087, %v1103
  %1107 = vrot.lane.b32.xlu0 %v1105, 64
  %v1108 = vpop.permute.xlu0 %1107
  %1110 = vst.msk [vmem:[#allocation2] sm:$0xff] %vm216, %v1108
  %v1111 = vadd.f32 %v173, %v1077
  %v1112 = vxor.u32 %v1111, 2147483648
  %v1113 = vmul.f32 %v1112, 1.442695
  %v1114 = vpow.pop %v1113
  %v1115 = vadd.f32 %v1114, 1.0
  %v1116 = vrcp.pop %v1115
  %v1117 = vmul.f32 1.0, %v1116
  %v1118 = vtanh.pop %v1111
  %v1119 = vmul.f32 %v1117, %v994
  %1121 = vrot.lane.b32.xlu0 %v1118, 64
  %v1122 = vpop.permute.xlu0 %1121
  %v1124 = vmul.f32 %v1117, %v1122
  %1126 = vrot.lane.b32.xlu0 %v1124, 32
  %v1127 = vpop.permute.xlu0 %1126
  %v1129 = vadd.f32 %v1119, %v1127
  %v1130 = vtanh.pop %v1129
  %1132 = vrot.lane.b32.xlu0 %v1130, 64
  %v1133 = vpop.permute.xlu0 %1132
  %v1135 = vmul.f32 %v1117, %v1133
  %1137 = vrot.lane.b32.xlu0 %v1135, 32
  %v1138 = vpop.permute.xlu0 %1137
  %1140 = vst.msk [vmem:[#allocation2] sm:$0xff] %vm210, %v1138
  %v1141 = vld [vmem:[#allocation2] sm:$0xff]
  %v1143 = vsel %vm219, %v1141, 0
  %1145 = vmatprep.subr.mxu0 %v182
  %1146 = vmatpush1.msra.mxu0 %v181
  %1147 = vmatprep.subr.mxu0 %v184
  %1148 = vmatpush1.msra.mxu0 %v183
  %1149 = vmatprep.subr.mxu0 %v186
  %1150 = vmatpush1.msra.mxu0 %v185
  %1151 = vmatprep.subr.mxu0 %v188
  %1152 = vmatpush1.msra.mxu0 %v187
  %1153 = vmatprep.subr.mxu0 %v190
  %1154 = vmatpush1.msra.mxu0 %v189
  %1155 = vmatprep.subr.mxu0 %v192
  %1156 = vmatpush1.msra.mxu0 %v191
  %1157 = vmatprep.subr.mxu0 %v194
  %1158 = vmatpush1.msra.mxu0 %v193
  %1159 = vmatprep.subr.mxu0 %v196
  %1160 = vmatpush1.msra.mxu0 %v195
  %1161 = vmatprep.subr.mxu0 0.0
  %1162 = vmatpush1.msra.mxu0 0.0
  %1163 = vmatprep.subr.mxu0 0.0
  %1164 = vmatpush1.msra.mxu0 0.0
  %1165 = vmatprep.subr.mxu0 0.0
  %1166 = vmatpush1.msra.mxu0 0.0
  %1167 = vmatprep.subr.mxu0 0.0
  %1168 = vmatpush1.msra.mxu0 0.0
  %1169 = vmatprep.subr.mxu0 0.0
  %1170 = vmatpush1.msra.mxu0 0.0
  %1171 = vmatprep.subr.mxu0 0.0
  %1172 = vmatpush1.msra.mxu0 0.0
  %1173 = vmatprep.subr.mxu0 0.0
  %1174 = vmatpush1.msra.mxu0 0.0
  %1175 = vmatprep.subr.mxu0 0.0
  %1176 = vmatpush1.msra.mxu0 0.0
  %1177 = vmatprep.subr.mxu0 0.0
  %1178 = vmatpush1.msra.mxu0 0.0
  %1179 = vmatprep.subr.mxu0 0.0
  %1180 = vmatpush1.msra.mxu0 0.0
  %1181 = vmatprep.subr.mxu0 0.0
  %1182 = vmatpush1.msra.mxu0 0.0
  %1183 = vmatprep.subr.mxu0 0.0
  %1184 = vmatpush1.msra.mxu0 0.0
  %1185 = vmatprep.subr.mxu0 0.0
  %1186 = vmatpush1.msra.mxu0 0.0
  %1187 = vmatprep.subr.mxu0 0.0
  %1188 = vmatpush1.msra.mxu0 0.0
  %1189 = vmatprep.subr.mxu0 0.0
  %1190 = vmatpush1.msra.mxu0 0.0
  %1191 = vmatprep.subr.mxu0 0.0
  %1192 = vmatpush1.msra.mxu0 0.0
  %1193 = vmatprep.subr.mxu0 0.0
  %1194 = vmatpush1.msra.mxu0 0.0
  %1195 = vmatprep.subr.mxu0 0.0
  %1196 = vmatpush1.msra.mxu0 0.0
  %1197 = vmatprep.subr.mxu0 0.0
  %1198 = vmatpush1.msra.mxu0 0.0
  %1199 = vmatprep.subr.mxu0 0.0
  %1200 = vmatpush1.msra.mxu0 0.0
  %1201 = vmatprep.subr.mxu0 0.0
  %1202 = vmatpush1.msra.mxu0 0.0
  %1203 = vmatprep.subr.mxu0 0.0
  %1204 = vmatpush1.msra.mxu0 0.0
  %1205 = vmatprep.subr.mxu0 0.0
  %1206 = vmatpush1.msra.mxu0 0.0
  %1207 = vmatprep.subr.mxu0 0.0
  %1208 = vmatpush1.msra.mxu0 0.0
  %1209 = vmatprep.mubr.f32.mxu0 0.0
  %1210 = vmatmul.mubr.f32.gmra.mrb[0].mxu0 %v1143
  %v1211 = vpop.f32.mrb[0].mxu0
  %v1212 = vadd.f32 0.0, %v1211
  %v1213 = vpop.f32.mrb[0].mxu0
  %v1214 = vadd.f32 0.0, %v1213
  %1215 = vdwg.mxu0
  %v1216 = vadd.f32 %v1214, %v202
  %v1217 = vxor.u32 %v1216, 2147483648
  %v1218 = vmul.f32 %v1217, 1.442695
  %v1219 = vpow.pop %v1218
  %v1220 = vadd.f32 %v1219, 1.0
  %v1221 = vrcp.pop %v1220
  %v1222 = vmul.f32 1.0, %v1221
  %v1223 = vtanh.pop %v1216
  %v1224 = vmul.f32 %v1222, %v1099
  %1226 = vrot.lane.b32.xlu0 %v1223, 64
  %v1227 = vpop.permute.xlu0 %1226
  %v1229 = vmul.f32 %v1222, %v1227
  %1231 = vrot.lane.b32.xlu0 %v1229, 32
  %v1232 = vpop.permute.xlu0 %1231
  %v1234 = vadd.f32 %v1224, %v1232
  %v1235 = vtanh.pop %v1234
  %1237 = vrot.lane.b32.xlu0 %v1235, 64
  %v1238 = vpop.permute.xlu0 %1237
  %v1240 = vmul.f32 %v1222, %v1238
  %1242 = vrot.lane.b32.xlu0 %v1240, 64
  %v1243 = vpop.permute.xlu0 %1242
  %1245 = vst.msk [vmem:[#allocation2] sm:$0xff] %vm216, %v1243
  %v1246 = vadd.f32 %v178, %v1212
  %v1247 = vxor.u32 %v1246, 2147483648
  %v1248 = vmul.f32 %v1247, 1.442695
  %v1249 = vpow.pop %v1248
  %v1250 = vadd.f32 %v1249, 1.0
  %v1251 = vrcp.pop %v1250
  %v1252 = vmul.f32 1.0, %v1251
  %v1253 = vtanh.pop %v1246
  %v1254 = vmul.f32 %v1252, %v1129
  %1256 = vrot.lane.b32.xlu0 %v1253, 64
  %v1257 = vpop.permute.xlu0 %1256
  %v1259 = vmul.f32 %v1252, %v1257
  %1261 = vrot.lane.b32.xlu0 %v1259, 32
  %v1262 = vpop.permute.xlu0 %1261
  %v1264 = vadd.f32 %v1254, %v1262
  %v1265 = vtanh.pop %v1264
  %1267 = vrot.lane.b32.xlu0 %v1265, 64
  %v1268 = vpop.permute.xlu0 %1267
  %v1270 = vmul.f32 %v1252, %v1268
  %1272 = vrot.lane.b32.xlu0 %v1270, 32
  %v1273 = vpop.permute.xlu0 %1272
  %1275 = vst.msk [vmem:[#allocation2] sm:$0xff] %vm210, %v1273
  %v1276 = vld [vmem:[#allocation2] sm:$0xff]
  %v1278 = vsel %vm219, %v1276, 0
  %1280 = vmatprep.subr.mxu0 %v182
  %1281 = vmatpush1.msra.mxu0 %v181
  %1282 = vmatprep.subr.mxu0 %v184
  %1283 = vmatpush1.msra.mxu0 %v183
  %1284 = vmatprep.subr.mxu0 %v186
  %1285 = vmatpush1.msra.mxu0 %v185
  %1286 = vmatprep.subr.mxu0 %v188
  %1287 = vmatpush1.msra.mxu0 %v187
  %1288 = vmatprep.subr.mxu0 %v190
  %1289 = vmatpush1.msra.mxu0 %v189
  %1290 = vmatprep.subr.mxu0 %v192
  %1291 = vmatpush1.msra.mxu0 %v191
  %1292 = vmatprep.subr.mxu0 %v194
  %1293 = vmatpush1.msra.mxu0 %v193
  %1294 = vmatprep.subr.mxu0 %v196
  %1295 = vmatpush1.msra.mxu0 %v195
  %1296 = vmatprep.subr.mxu0 0.0
  %1297 = vmatpush1.msra.mxu0 0.0
  %1298 = vmatprep.subr.mxu0 0.0
  %1299 = vmatpush1.msra.mxu0 0.0
  %1300 = vmatprep.subr.mxu0 0.0
  %1301 = vmatpush1.msra.mxu0 0.0
  %1302 = vmatprep.subr.mxu0 0.0
  %1303 = vmatpush1.msra.mxu0 0.0
  %1304 = vmatprep.subr.mxu0 0.0
  %1305 = vmatpush1.msra.mxu0 0.0
  %1306 = vmatprep.subr.mxu0 0.0
  %1307 = vmatpush1.msra.mxu0 0.0
  %1308 = vmatprep.subr.mxu0 0.0
  %1309 = vmatpush1.msra.mxu0 0.0
  %1310 = vmatprep.subr.mxu0 0.0
  %1311 = vmatpush1.msra.mxu0 0.0
  %1312 = vmatprep.subr.mxu0 0.0
  %1313 = vmatpush1.msra.mxu0 0.0
  %1314 = vmatprep.subr.mxu0 0.0
  %1315 = vmatpush1.msra.mxu0 0.0
  %1316 = vmatprep.subr.mxu0 0.0
  %1317 = vmatpush1.msra.mxu0 0.0
  %1318 = vmatprep.subr.mxu0 0.0
  %1319 = vmatpush1.msra.mxu0 0.0
  %1320 = vmatprep.subr.mxu0 0.0
  %1321 = vmatpush1.msra.mxu0 0.0
  %1322 = vmatprep.subr.mxu0 0.0
  %1323 = vmatpush1.msra.mxu0 0.0
  %1324 = vmatprep.subr.mxu0 0.0
  %1325 = vmatpush1.msra.mxu0 0.0
  %1326 = vmatprep.subr.mxu0 0.0
  %1327 = vmatpush1.msra.mxu0 0.0
  %1328 = vmatprep.subr.mxu0 0.0
  %1329 = vmatpush1.msra.mxu0 0.0
  %1330 = vmatprep.subr.mxu0 0.0
  %1331 = vmatpush1.msra.mxu0 0.0
  %1332 = vmatprep.subr.mxu0 0.0
  %1333 = vmatpush1.msra.mxu0 0.0
  %1334 = vmatprep.subr.mxu0 0.0
  %1335 = vmatpush1.msra.mxu0 0.0
  %1336 = vmatprep.subr.mxu0 0.0
  %1337 = vmatpush1.msra.mxu0 0.0
  %1338 = vmatprep.subr.mxu0 0.0
  %1339 = vmatpush1.msra.mxu0 0.0
  %1340 = vmatprep.subr.mxu0 0.0
  %1341 = vmatpush1.msra.mxu0 0.0
  %1342 = vmatprep.subr.mxu0 0.0
  %1343 = vmatpush1.msra.mxu0 0.0
  %1344 = vmatprep.mubr.f32.mxu0 0.0
  %1345 = vmatmul.mubr.f32.gmra.mrb[0].mxu0 %v1278
  %v1346 = vpop.f32.mrb[0].mxu0
  %v1347 = vpop.f32.mrb[0].mxu0
  %v1348 = vadd.f32 0.0, %v1347
  %1349 = vdwg.mxu0
  %v1350 = vadd.f32 %v1348, %v202
  %v1351 = vxor.u32 %v1350, 2147483648
  %v1352 = vmul.f32 %v1351, 1.442695
  %v1353 = vpow.pop %v1352
  %v1354 = vadd.f32 %v1353, 1.0
  %v1355 = vrcp.pop %v1354
  %v1356 = vmul.f32 1.0, %v1355
  %v1357 = vtanh.pop %v1350
  %v1358 = vmul.f32 %v1356, %v1234
  %1360 = vrot.lane.b32.xlu0 %v1357, 64
  %v1361 = vpop.permute.xlu0 %1360
  %v1363 = vmul.f32 %v1356, %v1361
  %1365 = vrot.lane.b32.xlu0 %v1363, 32
  %v1366 = vpop.permute.xlu0 %1365
  %v1368 = vadd.f32 %v1358, %v1366
  %v1369 = vtanh.pop %v1368
  %1371 = vrot.lane.b32.xlu0 %v1369, 64
  %v1372 = vpop.permute.xlu0 %1371
  %v1374 = vmul.f32 %v1356, %v1372
  %1376 = vrot.lane.b32.xlu0 %v1374, 64
  %v1377 = vpop.permute.xlu0 %1376
  %1379 = vst.msk [vmem:[#allocation2] sm:$0xff] %vm216, %v1377
  %v1380 = vld [vmem:[%s5] sm:$0xff]
  %v1381 = vld [vmem:[%s5 + $0x8] sm:$0xff]
  %v1382 = vld [vmem:[%s5 + $0x10] sm:$0xff]
  %v1383 = vld [vmem:[%s5 + $0x18] sm:$0xff]
  %v1384 = vld [vmem:[%s6] sm:$0x1]
  %v1386 = vlaneseq
  %v1387 = vshrl.u32 %v1386, 7
  %v1388 = vsub.s32 0, %v1387
  %v1389 = vrot.slane %v1384, %v1388
  %1391 = vrot.lane.b32.xlu0 %v1374, 32
  %v1392 = vpop.permute.xlu0 %1391
  %v1393 = vsel %vm210, %v1392, 0
  %1395 = vmatprep.subr.mxu0 0.0
  %1396 = vmatpush1.msra.mxu0 %v1380
  %1397 = vmatprep.subr.mxu0 0.0
  %1398 = vmatpush1.msra.mxu0 %v1381
  %1399 = vmatprep.subr.mxu0 0.0
  %1400 = vmatpush1.msra.mxu0 %v1382
  %1401 = vmatprep.subr.mxu0 0.0
  %1402 = vmatpush1.msra.mxu0 %v1383
  %1403 = vmatprep.subr.mxu0 0.0
  %1404 = vmatpush1.msra.mxu0 0.0
  %1405 = vmatprep.subr.mxu0 0.0
  %1406 = vmatpush1.msra.mxu0 0.0
  %1407 = vmatprep.subr.mxu0 0.0
  %1408 = vmatpush1.msra.mxu0 0.0
  %1409 = vmatprep.subr.mxu0 0.0
  %1410 = vmatpush1.msra.mxu0 0.0
  %1411 = vmatprep.subr.mxu0 0.0
  %1412 = vmatpush1.msra.mxu0 0.0
  %1413 = vmatprep.subr.mxu0 0.0
  %1414 = vmatpush1.msra.mxu0 0.0
  %1415 = vmatprep.subr.mxu0 0.0
  %1416 = vmatpush1.msra.mxu0 0.0
  %1417 = vmatprep.subr.mxu0 0.0
  %1418 = vmatpush1.msra.mxu0 0.0
  %1419 = vmatprep.subr.mxu0 0.0
  %1420 = vmatpush1.msra.mxu0 0.0
  %1421 = vmatprep.subr.mxu0 0.0
  %1422 = vmatpush1.msra.mxu0 0.0
  %1423 = vmatprep.subr.mxu0 0.0
  %1424 = vmatpush1.msra.mxu0 0.0
  %1425 = vmatprep.subr.mxu0 0.0
  %1426 = vmatpush1.msra.mxu0 0.0
  %1427 = vmatprep.subr.mxu0 0.0
  %1428 = vmatpush1.msra.mxu0 0.0
  %1429 = vmatprep.subr.mxu0 0.0
  %1430 = vmatpush1.msra.mxu0 0.0
  %1431 = vmatprep.subr.mxu0 0.0
  %1432 = vmatpush1.msra.mxu0 0.0
  %1433 = vmatprep.subr.mxu0 0.0
  %1434 = vmatpush1.msra.mxu0 0.0
  %1435 = vmatprep.subr.mxu0 0.0
  %1436 = vmatpush1.msra.mxu0 0.0
  %1437 = vmatprep.subr.mxu0 0.0
  %1438 = vmatpush1.msra.mxu0 0.0
  %1439 = vmatprep.subr.mxu0 0.0
  %1440 = vmatpush1.msra.mxu0 0.0
  %1441 = vmatprep.subr.mxu0 0.0
  %1442 = vmatpush1.msra.mxu0 0.0
  %1443 = vmatprep.subr.mxu0 0.0
  %1444 = vmatpush1.msra.mxu0 0.0
  %1445 = vmatprep.subr.mxu0 0.0
  %1446 = vmatpush1.msra.mxu0 0.0
  %1447 = vmatprep.subr.mxu0 0.0
  %1448 = vmatpush1.msra.mxu0 0.0
  %1449 = vmatprep.subr.mxu0 0.0
  %1450 = vmatpush1.msra.mxu0 0.0
  %1451 = vmatprep.subr.mxu0 0.0
  %1452 = vmatpush1.msra.mxu0 0.0
  %1453 = vmatprep.subr.mxu0 0.0
  %1454 = vmatpush1.msra.mxu0 0.0
  %1455 = vmatprep.subr.mxu0 0.0
  %1456 = vmatpush1.msra.mxu0 0.0
  %1457 = vmatprep.subr.mxu0 0.0
  %1458 = vmatpush1.msra.mxu0 0.0
  %1459 = vmatprep.mubr.f32.mxu0 0.0
  %1460 = vmatmul.mubr.f32.gmra.mrb[0].mxu0 %v1393
  %v1461 = vpop.f32.mrb[0].mxu0
  %v1462 = vadd.f32 %v1389, %v1461
  %v1463 = vpop.f32.mrb[0].mxu0
  %1464 = vdwg.mxu0
  %vm1465 = vcmask 39936
  %1466 = vst.msk [vmem:[%s9] sm:$0xff] %vm1465, %v1462
  %1467 = vst.msk [vmem:[%s10] sm:$0xff] %vm210, %v1273
  %s1469 = scalar_lea.vmem %s10, 8
  %1470 = vst.msk [vmem:[%s1469] sm:$0xff] %vm210, %v1392
  %1472 = vrot.lane.b32.xlu0 %v1264, 96
  %v1473 = vpop.permute.xlu0 %1472
  %1475 = vst.msk [vmem:[%s11] sm:$0xff] %vm210, %v1473
  %1477 = vrot.lane.b32.xlu0 %v1368, 96
  %v1478 = vpop.permute.xlu0 %1477
  %s1480 = scalar_lea.vmem %s11, 8
  %1481 = vst.msk [vmem:[%s1480] sm:$0xff] %vm210, %v1478
  // Predicated region
  $region38: #{stock_rnn_forward.1} parent=0 // pred_check
    _
  $region39: #{stock_rnn_forward.1} parent=0 // pred_check_branch
    %1483 = sbr.rel (0) target = $region41
  $region40: #{stock_rnn_forward.1} parent=0 // pred_region
    _
  $region41: #{stock_rnn_forward.1} parent=0 // pred_fallthru
    _
  // Predicated region
  $region42: #{stock_rnn_forward.1} parent=0 // pred_check
    _
  $region43: #{stock_rnn_forward.1} parent=0 // pred_check_branch
    %1485 = sbr.rel (0) target = $region45
  $region44: #{stock_rnn_forward.1} parent=0 // pred_region
    _
  $region45: #{stock_rnn_forward.1} parent=0 // pred_fallthru
    _
  // Predicated region
  $region46: #{stock_rnn_forward.1} parent=0 // pred_check
    _
  $region47: #{stock_rnn_forward.1} parent=0 // pred_check_branch
    %1487 = sbr.rel (0) target = $region49
  $region48: #{stock_rnn_forward.1} parent=0 // pred_region
    _
  $region49: #{stock_rnn_forward.1} parent=0 // pred_fallthru
    _
  // Predicated region
  $region50: #{stock_rnn_forward.1} parent=0 // pred_check
    _
  $region51: #{stock_rnn_forward.1} parent=0 // pred_check_branch
    %1489 = sbr.rel (0) target = $region53
  $region52: #{stock_rnn_forward.1} parent=0 // pred_region
    _
  $region53: #{stock_rnn_forward.1} parent=0 // pred_fallthru
    _
  // Predicated region
  $region54: #{stock_rnn_forward.1} parent=0 // pred_check
    _
  $region55: #{stock_rnn_forward.1} parent=0 // pred_check_branch
    %1491 = sbr.rel (0) target = $region57
  $region56: #{stock_rnn_forward.1} parent=0 // pred_region
    _
  $region57: #{stock_rnn_forward.1} parent=0 // pred_fallthru
    _
  // Predicated region
  $region58: #{stock_rnn_forward.1} parent=0 // pred_check
    _
  $region59: #{stock_rnn_forward.1} parent=0 // pred_check_branch
    %1493 = sbr.rel (0) target = $region61
  $region60: #{stock_rnn_forward.1} parent=0 // pred_region
    _
  $region61: #{stock_rnn_forward.1} parent=0 // pred_fallthru
    _

</llo_original>
